<compile_context>
chip_gen: v5e
topology: v5e:2x2
jax: 0.10.0
libtpu: 0.0.40
codegen_flags: <defaults>
</compile_context>

<pallas_src>
import functools

import jax
import jax.numpy as jnp
from jax import lax
from jax.experimental import pallas as pl
from jax.experimental.pallas import tpu as pltpu


def _decorr_kernel(x_ref, w_ref, b_ref, o_ref, *, eps, n_iter, samples,
                   chans_per_group, true_m):
    # x_ref / o_ref: (B*K, G, S_pad) -- sample bi owns rows [bi*K, bi*K + K)
    # w_ref: (G, G)   b_ref: (G, 1)
    B = samples
    K = chans_per_group
    _, G, S_pad = x_ref.shape
    M = true_m                      # true (unpadded) element count per group = K*H*W
    inv_m = 1.0 / M

    # ---- constants hoisted out of the per-sample loop (built once per grid step) ----
    row = lax.broadcasted_iota(jnp.int32, (G, G), 0)
    col = lax.broadcasted_iota(jnp.int32, (G, G), 1)
    eye = (row == col).astype(jnp.float32)
    eye3 = 3.0 * eye
    eps_eye = eps * eye
    w = w_ref[...].astype(jnp.float32)
    bias = b_ref[...].astype(jnp.float32)

    # bf16 inputs feed the MXU directly (f32 accumulation); tiny GxG NS math is f32.
    mm_dtype = jnp.bfloat16 if x_ref.dtype == jnp.bfloat16 else jnp.float32
    ones_col = jnp.ones((K * S_pad, 1), dtype=mm_dtype)   # for Σx via the MXU

    # Unrolled over the B samples in this block: B independent Newton-Schulz chains
    # interleave in the MXU pipeline and hide its serial push/pop latency.
    for bi in range(B):
        base = bi * K

        # ---- fuse the K (G, S_pad) tiles into one (G, K*S_pad) slab (lane concat,
        # offsets are multiples of 128; the only staging copy in the kernel). ----
        if K == 1:
            slab = x_ref[base].astype(mm_dtype)
        else:
            slab = jnp.concatenate(
                [x_ref[base + k].astype(mm_dtype) for k in range(K)], axis=1)

        # ---- uncentered second moment + mean (no centered copy is materialized) ----
        xxT = lax.dot_general(slab, slab, (((1,), (1,)), ((), ())),
                              preferred_element_type=jnp.float32)          # Σ x xᵀ (G,G)
        rsum = jnp.dot(slab, ones_col, preferred_element_type=jnp.float32)  # Σ x   (G,1)
        mean = rsum * inv_m                                                 # (G, 1)
        outer = lax.dot_general(mean, mean, (((1,), (1,)), ((), ())),
                                preferred_element_type=jnp.float32)         # m mᵀ (G,G)
        cov = xxT * inv_m - outer + eps_eye                                  # (G, G)

        # ---- Newton-Schulz inverse square root (fully unrolled, f32) ----
        normA = jnp.sqrt(jnp.sum(cov * cov, axis=(0, 1), keepdims=True))    # (1, 1)
        Y = cov / normA
        Z = eye
        for _ in range(n_iter):
            T = 0.5 * (eye3 - jnp.dot(Z, Y, preferred_element_type=jnp.float32))
            Y = jnp.dot(Y, T, preferred_element_type=jnp.float32)
            Z = jnp.dot(T, Z, preferred_element_type=jnp.float32)
        decorr = Z * lax.rsqrt(normA)                                        # (G, G)

        # ---- affine + whitening with the mean folded into the bias:
        #      out = (w @ decorr) @ x + (bias - (w @ decorr) @ m)  ----
        wd_f32 = jnp.dot(w, decorr, preferred_element_type=jnp.float32)      # (G, G)
        bias_eff = bias - jnp.dot(wd_f32, mean, preferred_element_type=jnp.float32)
        out_slab = jnp.dot(wd_f32.astype(mm_dtype), slab,
                           preferred_element_type=jnp.float32) + bias_eff    # (G, K*S_pad)

        # Lane-dense stores (S_pad is a multiple of 128).
        # TODO(synk): for bf16 outputs, store pairs of k as (2*G, S_pad) slabs to
        # fill packed (16,128) vregs; per-k stores kept here (demo dtype is f32).
        for k in range(K):
            o_ref[base + k] = out_slab[:, k * S_pad:(k + 1) * S_pad].astype(o_ref.dtype)


def feature_decorr_pallas(x, weight1, bias1, weight2, bias2, *,
                          num_groups=8, eps=1e-5, n_iter=10, affine=True):
    N, C, H, W = x.shape
    G = num_groups
    c = (C // G) * G
    if c == 0:
        c = C
        G = C
    K = c // G
    S = H * W
    S_pad = max(128, ((S + 127) // 128) * 128)

    # Pure reshape (no HBM transpose): channel ch = k*G + g of x[:, :c] maps to
    # row (n*K + k) / sublane g / lane s of the (N*K, G, S) kernel operand.
    x1 = x[:, :c].reshape(N * K, G, S)
    if S_pad != S:
        # Zero lane-padding -> every kernel store is an unmasked vst; sums stay exact.
        x1 = jnp.pad(x1, ((0, 0), (0, 0), (0, S_pad - S)))

    if affine:
        w = jnp.asarray(weight1).reshape(weight1.shape[-2], weight1.shape[-1])[:G, :G]
        b = jnp.asarray(bias1).reshape(-1)[:G].reshape(G, 1)      # always (G, 1)
    else:
        w = jnp.eye(G, dtype=jnp.float32)
        b = jnp.zeros((G, 1), dtype=jnp.float32)
    w = w.astype(jnp.float32)
    b = b.astype(jnp.float32)

    # ---- generation-aware VMEM budget & samples-per-block B ----
    itemsize = jnp.dtype(x.dtype).itemsize
    try:
        vmem_cap = int(pltpu.get_tpu_info().vmem_capacity_bytes)
    except Exception:
        vmem_cap = 64 << 20                       # conservative (v7x per-TC size)
    vmem_budget = max(8 << 20, int(0.75 * vmem_cap))   # headroom for Mosaic scratch

    kind = ""
    try:
        kind = str(jax.devices()[0].device_kind).lower()
    except Exception:
        pass
    num_tc = 2 if "v7" in kind else 1             # v7x: 2 TensorCores share the grid

    per_sample_pipe = 4 * K * G * S_pad * itemsize          # dbl-buffered in + out blocks
    transient = K * G * S_pad * (itemsize + 4) + 64 * G * G + (1 << 20)
    b_cap = max(1, (vmem_budget - transient) // per_sample_pipe)

    divisors = [d for d in range(1, N + 1) if N % d == 0]
    fitting = [d for d in divisors if d <= b_cap] or [1]
    if num_tc > 1:
        even = [d for d in fitting if (N // d) % num_tc == 0]     # keep both TCs busy
        multi = [d for d in fitting if (N // d) >= num_tc]
        pool = even or multi or fitting
    else:
        pool = fitting                                            # grid=1 is fine on 1 TC
    B = max(pool)

    vmem_need = B * per_sample_pipe + transient + (2 << 20)
    vmem_limit = int(min(max(vmem_need, 8 << 20), vmem_budget))

    kernel = functools.partial(_decorr_kernel, eps=float(eps), n_iter=int(n_iter),
                               samples=int(B), chans_per_group=int(K),
                               true_m=int(K * S))

    y1 = pl.pallas_call(
        kernel,
        out_shape=jax.ShapeDtypeStruct((N * K, G, S_pad), x.dtype),
        grid_spec=pltpu.PrefetchScalarGridSpec(
            num_scalar_prefetch=0,
            grid=(N // B,),
            in_specs=[
                pl.BlockSpec((B * K, G, S_pad), lambda n: (n, 0, 0)),
                pl.BlockSpec((G, G), lambda n: (0, 0)),
                pl.BlockSpec((G, 1), lambda n: (0, 0)),
            ],
            out_specs=pl.BlockSpec((B * K, G, S_pad), lambda n: (n, 0, 0)),
        ),
        compiler_params=pltpu.CompilerParams(
            dimension_semantics=("parallel",),
            vmem_limit_bytes=vmem_limit),
    )(x1, w, b)

    if S_pad != S:
        y1 = y1[:, :, :S]
    # Pure reshape back: (N*K, G, S) -> (N, c, H, W) with channel = k*G + g.
    y1 = y1.reshape(N, c, H, W)

    if c != C:
        # TODO(synk): tail-channel standardization kept in plain JAX (simple
        # elementwise glue; negligible at these shapes).
        x_tail = x[:, c:]
        flat = x_tail.reshape(N, -1)
        mean = flat.mean(-1).reshape(N, 1, 1, 1)
        var = jnp.var(flat, axis=-1, ddof=1).reshape(N, 1, 1, 1)
        x_tail = (x_tail - mean) / jnp.sqrt(var + eps)
        if affine:
            x_tail = weight2 * x_tail + bias2
        y1 = jnp.concatenate([y1, x_tail.astype(y1.dtype)], axis=1)
    return y1


# ----------------------- pure-JAX reference (for verification) -----------------------
def _isqrt_newton_schulz_ref(A, num_iters):
    B, dim, _ = A.shape
    normA = jnp.sqrt(jnp.sum(A.reshape(B, -1) ** 2, axis=1)).reshape(B, 1, 1)
    Y = A / normA
    I = jnp.broadcast_to(jnp.eye(dim, dtype=A.dtype), A.shape)
    Z = jnp.broadcast_to(jnp.eye(dim, dtype=A.dtype), A.shape)
    for _ in range(num_iters):
        T = 0.5 * (3.0 * I - jnp.einsum('bij,bjk->bik', Z, Y))
        Y = jnp.einsum('bij,bjk->bik', Y, T)
        Z = jnp.einsum('bij,bjk->bik', T, Z)
    return Z / jnp.sqrt(normA)


def feature_decorr_ref(x, weight1, bias1, weight2, bias2, *,
                       num_groups=8, eps=1e-5, n_iter=10, affine=True):
    N, C, H, W = x.shape
    G = num_groups
    c = (C // G) * G
    if c == 0:
        c = C
        G = C
    x1 = x[:, :c].reshape(N, c // G, G, H, W).transpose(0, 2, 1, 3, 4).reshape(N, G, -1)
    mean = x1.mean(-1, keepdims=True)
    xc = x1 - mean
    cov = jnp.einsum('bgm,bhm->bgh', xc, xc) / xc.shape[2] \
        + eps * jnp.eye(G, dtype=jnp.float32)[None]
    decorr = _isqrt_newton_schulz_ref(cov.astype(jnp.float32), n_iter)
    if affine:
        w = jnp.asarray(weight1).reshape(weight1.shape[-2], weight1.shape[-1])[:G, :G]
        b = jnp.asarray(bias1).reshape(-1)[:G].reshape(1, G, 1)
        x1 = jnp.einsum('ij,bjm->bim', w @ decorr[0] if N == 1 else w, xc) \
            if False else jnp.einsum('bij,bjm->bim', jnp.einsum('ij,bjk->bik', w, decorr), xc) + b
    else:
        x1 = jnp.einsum('bij,bjm->bim', decorr, xc)
    x1 = x1.reshape(N, G, c // G, H, W).transpose(0, 2, 1, 3, 4).reshape(N, c, H, W)
    x1 = x1.astype(x.dtype)
    if c != C:
        x_tail = x[:, c:]
        flat = x_tail.reshape(N, -1)
        m = flat.mean(-1).reshape(N, 1, 1, 1)
        v = jnp.var(flat, axis=-1, ddof=1).reshape(N, 1, 1, 1)
        x_tail = (x_tail - m) / jnp.sqrt(v + eps)
        if affine:
            x_tail = weight2 * x_tail + bias2
        x1 = jnp.concatenate([x1, x_tail.astype(x1.dtype)], axis=1)
    return x1


if __name__ == "__main__":
    key = jax.random.PRNGKey(0)
    k1, k2 = jax.random.split(key)

    # Test 1: N=2, C=16, H=W=8, num_groups=8 -> G=8, K=2, S=64 (lane-padded to 128).
    # Input has a large mean (offset 2.5) to exercise the uncentered-cov cancellation.
    N, C, H, W = 2, 16, 8, 8
    num_groups = 8
    x = jax.random.normal(k1, (N, C, H, W), dtype=jnp.float32) + 2.5

    weight1 = jnp.eye(num_groups, dtype=jnp.float32)[None]          # (1, G, G)
    bias1 = jnp.zeros((1, num_groups, 1), dtype=jnp.float32)        # (1, G, 1)
    weight2 = jnp.ones((1, 1, 1, 1), dtype=jnp.float32)
    bias2 = jnp.zeros((1, 1, 1, 1), dtype=jnp.float32)

    out = feature_decorr_pallas(x, weight1, bias1, weight2, bias2,
                                num_groups=num_groups, eps=1e-5, n_iter=10, affine=True)
    out = jax.block_until_ready(out)
    ref = feature_decorr_ref(x, weight1, bias1, weight2, bias2,
                             num_groups=num_groups, eps=1e-5, n_iter=10, affine=True)
    assert out.shape == x.shape, (out.shape, x.shape)
    assert bool(jnp.all(jnp.isfinite(out)))
    assert jnp.allclose(out, ref, rtol=5e-2, atol=5e-2), \
        float(jnp.max(jnp.abs(out - ref)))

    # Test 2: tail channels (C not divisible by G) + heavily lane-padded spatial dim.
    N2, C2, H2, W2 = 2, 10, 3, 5
    ng2 = 4
    x2 = jax.random.normal(k2, (N2, C2, H2, W2), dtype=jnp.float32)
    w1b = jnp.eye(ng2, dtype=jnp.float32)[None]
    b1b = jnp.zeros((1, ng2, 1), dtype=jnp.float32)
    out2 = feature_decorr_pallas(x2, w1b, b1b, weight2, bias2,
                                 num_groups=ng2, eps=1e-5, n_iter=10, affine=True)
    out2 = jax.block_until_ready(out2)
    ref2 = feature_decorr_ref(x2, w1b, b1b, weight2, bias2,
                              num_groups=ng2, eps=1e-5, n_iter=10, affine=True)
    assert out2.shape == x2.shape, (out2.shape, x2.shape)
    assert bool(jnp.all(jnp.isfinite(out2)))
    assert jnp.allclose(out2, ref2, rtol=5e-2, atol=5e-2), \
        float(jnp.max(jnp.abs(out2 - ref2)))

    print("KERNEL_OK")
</pallas_src>

<mosaic_0001>
module attributes {stable_mosaic.version = 11 : i64} {
  func.func @_decorr_kernel(%arg0: i32, %arg1: memref<4x8x128xf32, #tpu.memory_space<vmem>>, %arg2: memref<8x8xf32, #tpu.memory_space<vmem>>, %arg3: memref<8x1xf32, #tpu.memory_space<vmem>>, %arg4: memref<4x8x128xf32, #tpu.memory_space<vmem>>) attributes {dimension_semantics = [#tpu.dimension_semantics<parallel>], iteration_bounds = array<i64: 1>, scalar_prefetch = 0 : i64, scratch_operands = 0 : i64, tpu.core_type = #tpu.core_type<tc>, window_params = [{transform_indices = @transform_0, window_bounds = array<i64: 4, 8, 128>}, {pipeline_mode = #tpu.pipeline_mode<synchronous>, transform_indices = @transform_1, window_bounds = array<i64: 8, 8>}, {pipeline_mode = #tpu.pipeline_mode<synchronous>, transform_indices = @transform_2, window_bounds = array<i64: 8, 1>}, {transform_indices = @transform_3, window_bounds = array<i64: 4, 8, 128>}]} {
    %0 = tpu.iota {dimensions = array<i32: 0>} : vector<8x8xi32>
    %1 = tpu.iota {dimensions = array<i32: 1>} : vector<8x8xi32>
    %2 = arith.cmpi eq, %0, %1 : vector<8x8xi32>
    %3 = arith.extui %2 : vector<8x8xi1> to vector<8x8xi32>
    %4 = arith.sitofp %3 : vector<8x8xi32> to vector<8x8xf32>
    %cst = arith.constant 3.000000e+00 : f32
    %5 = vector.broadcast %cst : f32 to vector<8x8xf32>
    %6 = arith.mulf %5, %4 : vector<8x8xf32>
    %cst_0 = arith.constant 9.99999974E-6 : f32
    %7 = vector.broadcast %cst_0 : f32 to vector<8x8xf32>
    %8 = arith.mulf %7, %4 : vector<8x8xf32>
    %c0 = arith.constant 0 : index
    %c0_1 = arith.constant 0 : index
    %9 = vector.load %arg2[%c0, %c0_1] : memref<8x8xf32, #tpu.memory_space<vmem>>, vector<8x8xf32>
    %c0_2 = arith.constant 0 : index
    %c0_3 = arith.constant 0 : index
    %10 = vector.load %arg3[%c0_2, %c0_3] : memref<8x1xf32, #tpu.memory_space<vmem>>, vector<8x1xf32>
    %cst_4 = arith.constant 1.000000e+00 : f32
    %11 = vector.broadcast %cst_4 : f32 to vector<256x1xf32>
    %c0_5 = arith.constant 0 : index
    %c0_6 = arith.constant 0 : index
    %c0_7 = arith.constant 0 : index
    %12 = vector.load %arg1[%c0_5, %c0_6, %c0_7] : memref<4x8x128xf32, #tpu.memory_space<vmem>>, vector<1x8x128xf32>
    %13 = vector.shape_cast %12 : vector<1x8x128xf32> to vector<8x128xf32>
    %c1 = arith.constant 1 : index
    %c0_8 = arith.constant 0 : index
    %c0_9 = arith.constant 0 : index
    %14 = vector.load %arg1[%c1, %c0_8, %c0_9] : memref<4x8x128xf32, #tpu.memory_space<vmem>>, vector<1x8x128xf32>
    %15 = vector.shape_cast %14 : vector<1x8x128xf32> to vector<8x128xf32>
    %16 = tpu.concatenate %13, %15 in 1 : vector<8x128xf32>, vector<8x128xf32> -> vector<8x256xf32>
    %cst_10 = arith.constant dense<0.000000e+00> : vector<8x8xf32>
    %17 = tpu.matmul %16, %16, %cst_10 {dimension_numbers = #tpu.dot_dimension_numbers<[1], [1], [0], [0], [0, 0, 1, 0], [], []>} : vector<8x256xf32>, vector<8x256xf32>, vector<8x8xf32> -> vector<8x8xf32>
    %cst_11 = arith.constant dense<0.000000e+00> : vector<8x1xf32>
    %18 = tpu.matmul %16, %11, %cst_11 {dimension_numbers = #tpu.dot_dimension_numbers<[1], [0], [0], [1], [0, 0, 1, 1], [], []>} : vector<8x256xf32>, vector<256x1xf32>, vector<8x1xf32> -> vector<8x1xf32>
    %cst_12 = arith.constant 7.812500e-03 : f32
    %19 = vector.broadcast %cst_12 : f32 to vector<8x1xf32>
    %20 = arith.mulf %18, %19 : vector<8x1xf32>
    %cst_13 = arith.constant dense<0.000000e+00> : vector<8x8xf32>
    %21 = tpu.matmul %20, %20, %cst_13 {dimension_numbers = #tpu.dot_dimension_numbers<[1], [1], [0], [0], [0, 0, 1, 0], [], []>} : vector<8x1xf32>, vector<8x1xf32>, vector<8x8xf32> -> vector<8x8xf32>
    %cst_14 = arith.constant 7.812500e-03 : f32
    %22 = vector.broadcast %cst_14 : f32 to vector<8x8xf32>
    %23 = arith.mulf %17, %22 : vector<8x8xf32>
    %24 = arith.subf %23, %21 : vector<8x8xf32>
    %25 = arith.addf %24, %8 : vector<8x8xf32>
    %26 = arith.mulf %25, %25 : vector<8x8xf32>
    %27 = vector.shape_cast %26 : vector<8x8xf32> to vector<1x8x8xf32>
    %cst_15 = arith.constant dense<0.000000e+00> : vector<1xf32>
    %28 = vector.multi_reduction <add>, %27, %cst_15 [1, 2] : vector<1x8x8xf32> to vector<1xf32>
    %29 = vector.shape_cast %28 : vector<1xf32> to vector<1x1x1xf32>
    %30 = vector.extract %29[0, 0, 0] : f32 from vector<1x1x1xf32>
    %31 = vector.broadcast %30 : f32 to vector<1x1xf32>
    %32 = math.sqrt %31 : vector<1x1xf32>
    %33 = vector.broadcast %32 : vector<1x1xf32> to vector<8x8xf32>
    %34 = arith.divf %25, %33 : vector<8x8xf32>
    %cst_16 = arith.constant dense<0.000000e+00> : vector<8x8xf32>
    %35 = tpu.matmul %4, %34, %cst_16 {dimension_numbers = #tpu.dot_dimension_numbers<[1], [0], [0], [1], [0, 0, 1, 1], [], []>} : vector<8x8xf32>, vector<8x8xf32>, vector<8x8xf32> -> vector<8x8xf32>
    %36 = arith.subf %6, %35 : vector<8x8xf32>
    %cst_17 = arith.constant 5.000000e-01 : f32
    %37 = vector.broadcast %cst_17 : f32 to vector<8x8xf32>
    %38 = arith.mulf %37, %36 : vector<8x8xf32>
    %cst_18 = arith.constant dense<0.000000e+00> : vector<8x8xf32>
    %39 = tpu.matmul %34, %38, %cst_18 {dimension_numbers = #tpu.dot_dimension_numbers<[1], [0], [0], [1], [0, 0, 1, 1], [], []>} : vector<8x8xf32>, vector<8x8xf32>, vector<8x8xf32> -> vector<8x8xf32>
    %cst_19 = arith.constant dense<0.000000e+00> : vector<8x8xf32>
    %40 = tpu.matmul %38, %4, %cst_19 {dimension_numbers = #tpu.dot_dimension_numbers<[1], [0], [0], [1], [0, 0, 1, 1], [], []>} : vector<8x8xf32>, vector<8x8xf32>, vector<8x8xf32> -> vector<8x8xf32>
    %cst_20 = arith.constant dense<0.000000e+00> : vector<8x8xf32>
    %41 = tpu.matmul %40, %39, %cst_20 {dimension_numbers = #tpu.dot_dimension_numbers<[1], [0], [0], [1], [0, 0, 1, 1], [], []>} : vector<8x8xf32>, vector<8x8xf32>, vector<8x8xf32> -> vector<8x8xf32>
    %42 = arith.subf %6, %41 : vector<8x8xf32>
    %cst_21 = arith.constant 5.000000e-01 : f32
    %43 = vector.broadcast %cst_21 : f32 to vector<8x8xf32>
    %44 = arith.mulf %43, %42 : vector<8x8xf32>
    %cst_22 = arith.constant dense<0.000000e+00> : vector<8x8xf32>
    %45 = tpu.matmul %39, %44, %cst_22 {dimension_numbers = #tpu.dot_dimension_numbers<[1], [0], [0], [1], [0, 0, 1, 1], [], []>} : vector<8x8xf32>, vector<8x8xf32>, vector<8x8xf32> -> vector<8x8xf32>
    %cst_23 = arith.constant dense<0.000000e+00> : vector<8x8xf32>
    %46 = tpu.matmul %44, %40, %cst_23 {dimension_numbers = #tpu.dot_dimension_numbers<[1], [0], [0], [1], [0, 0, 1, 1], [], []>} : vector<8x8xf32>, vector<8x8xf32>, vector<8x8xf32> -> vector<8x8xf32>
    %cst_24 = arith.constant dense<0.000000e+00> : vector<8x8xf32>
    %47 = tpu.matmul %46, %45, %cst_24 {dimension_numbers = #tpu.dot_dimension_numbers<[1], [0], [0], [1], [0, 0, 1, 1], [], []>} : vector<8x8xf32>, vector<8x8xf32>, vector<8x8xf32> -> vector<8x8xf32>
    %48 = arith.subf %6, %47 : vector<8x8xf32>
    %cst_25 = arith.constant 5.000000e-01 : f32
    %49 = vector.broadcast %cst_25 : f32 to vector<8x8xf32>
    %50 = arith.mulf %49, %48 : vector<8x8xf32>
    %cst_26 = arith.constant dense<0.000000e+00> : vector<8x8xf32>
    %51 = tpu.matmul %45, %50, %cst_26 {dimension_numbers = #tpu.dot_dimension_numbers<[1], [0], [0], [1], [0, 0, 1, 1], [], []>} : vector<8x8xf32>, vector<8x8xf32>, vector<8x8xf32> -> vector<8x8xf32>
    %cst_27 = arith.constant dense<0.000000e+00> : vector<8x8xf32>
    %52 = tpu.matmul %50, %46, %cst_27 {dimension_numbers = #tpu.dot_dimension_numbers<[1], [0], [0], [1], [0, 0, 1, 1], [], []>} : vector<8x8xf32>, vector<8x8xf32>, vector<8x8xf32> -> vector<8x8xf32>
    %cst_28 = arith.constant dense<0.000000e+00> : vector<8x8xf32>
    %53 = tpu.matmul %52, %51, %cst_28 {dimension_numbers = #tpu.dot_dimension_numbers<[1], [0], [0], [1], [0, 0, 1, 1], [], []>} : vector<8x8xf32>, vector<8x8xf32>, vector<8x8xf32> -> vector<8x8xf32>
    %54 = arith.subf %6, %53 : vector<8x8xf32>
    %cst_29 = arith.constant 5.000000e-01 : f32
    %55 = vector.broadcast %cst_29 : f32 to vector<8x8xf32>
    %56 = arith.mulf %55, %54 : vector<8x8xf32>
    %cst_30 = arith.constant dense<0.000000e+00> : vector<8x8xf32>
    %57 = tpu.matmul %51, %56, %cst_30 {dimension_numbers = #tpu.dot_dimension_numbers<[1], [0], [0], [1], [0, 0, 1, 1], [], []>} : vector<8x8xf32>, vector<8x8xf32>, vector<8x8xf32> -> vector<8x8xf32>
    %cst_31 = arith.constant dense<0.000000e+00> : vector<8x8xf32>
    %58 = tpu.matmul %56, %52, %cst_31 {dimension_numbers = #tpu.dot_dimension_numbers<[1], [0], [0], [1], [0, 0, 1, 1], [], []>} : vector<8x8xf32>, vector<8x8xf32>, vector<8x8xf32> -> vector<8x8xf32>
    %cst_32 = arith.constant dense<0.000000e+00> : vector<8x8xf32>
    %59 = tpu.matmul %58, %57, %cst_32 {dimension_numbers = #tpu.dot_dimension_numbers<[1], [0], [0], [1], [0, 0, 1, 1], [], []>} : vector<8x8xf32>, vector<8x8xf32>, vector<8x8xf32> -> vector<8x8xf32>
    %60 = arith.subf %6, %59 : vector<8x8xf32>
    %cst_33 = arith.constant 5.000000e-01 : f32
    %61 = vector.broadcast %cst_33 : f32 to vector<8x8xf32>
    %62 = arith.mulf %61, %60 : vector<8x8xf32>
    %cst_34 = arith.constant dense<0.000000e+00> : vector<8x8xf32>
    %63 = tpu.matmul %57, %62, %cst_34 {dimension_numbers = #tpu.dot_dimension_numbers<[1], [0], [0], [1], [0, 0, 1, 1], [], []>} : vector<8x8xf32>, vector<8x8xf32>, vector<8x8xf32> -> vector<8x8xf32>
    %cst_35 = arith.constant dense<0.000000e+00> : vector<8x8xf32>
    %64 = tpu.matmul %62, %58, %cst_35 {dimension_numbers = #tpu.dot_dimension_numbers<[1], [0], [0], [1], [0, 0, 1, 1], [], []>} : vector<8x8xf32>, vector<8x8xf32>, vector<8x8xf32> -> vector<8x8xf32>
    %cst_36 = arith.constant dense<0.000000e+00> : vector<8x8xf32>
    %65 = tpu.matmul %64, %63, %cst_36 {dimension_numbers = #tpu.dot_dimension_numbers<[1], [0], [0], [1], [0, 0, 1, 1], [], []>} : vector<8x8xf32>, vector<8x8xf32>, vector<8x8xf32> -> vector<8x8xf32>
    %66 = arith.subf %6, %65 : vector<8x8xf32>
    %cst_37 = arith.constant 5.000000e-01 : f32
    %67 = vector.broadcast %cst_37 : f32 to vector<8x8xf32>
    %68 = arith.mulf %67, %66 : vector<8x8xf32>
    %cst_38 = arith.constant dense<0.000000e+00> : vector<8x8xf32>
    %69 = tpu.matmul %63, %68, %cst_38 {dimension_numbers = #tpu.dot_dimension_numbers<[1], [0], [0], [1], [0, 0, 1, 1], [], []>} : vector<8x8xf32>, vector<8x8xf32>, vector<8x8xf32> -> vector<8x8xf32>
    %cst_39 = arith.constant dense<0.000000e+00> : vector<8x8xf32>
    %70 = tpu.matmul %68, %64, %cst_39 {dimension_numbers = #tpu.dot_dimension_numbers<[1], [0], [0], [1], [0, 0, 1, 1], [], []>} : vector<8x8xf32>, vector<8x8xf32>, vector<8x8xf32> -> vector<8x8xf32>
    %cst_40 = arith.constant dense<0.000000e+00> : vector<8x8xf32>
    %71 = tpu.matmul %70, %69, %cst_40 {dimension_numbers = #tpu.dot_dimension_numbers<[1], [0], [0], [1], [0, 0, 1, 1], [], []>} : vector<8x8xf32>, vector<8x8xf32>, vector<8x8xf32> -> vector<8x8xf32>
    %72 = arith.subf %6, %71 : vector<8x8xf32>
    %cst_41 = arith.constant 5.000000e-01 : f32
    %73 = vector.broadcast %cst_41 : f32 to vector<8x8xf32>
    %74 = arith.mulf %73, %72 : vector<8x8xf32>
    %cst_42 = arith.constant dense<0.000000e+00> : vector<8x8xf32>
    %75 = tpu.matmul %69, %74, %cst_42 {dimension_numbers = #tpu.dot_dimension_numbers<[1], [0], [0], [1], [0, 0, 1, 1], [], []>} : vector<8x8xf32>, vector<8x8xf32>, vector<8x8xf32> -> vector<8x8xf32>
    %cst_43 = arith.constant dense<0.000000e+00> : vector<8x8xf32>
    %76 = tpu.matmul %74, %70, %cst_43 {dimension_numbers = #tpu.dot_dimension_numbers<[1], [0], [0], [1], [0, 0, 1, 1], [], []>} : vector<8x8xf32>, vector<8x8xf32>, vector<8x8xf32> -> vector<8x8xf32>
    %cst_44 = arith.constant dense<0.000000e+00> : vector<8x8xf32>
    %77 = tpu.matmul %76, %75, %cst_44 {dimension_numbers = #tpu.dot_dimension_numbers<[1], [0], [0], [1], [0, 0, 1, 1], [], []>} : vector<8x8xf32>, vector<8x8xf32>, vector<8x8xf32> -> vector<8x8xf32>
    %78 = arith.subf %6, %77 : vector<8x8xf32>
    %cst_45 = arith.constant 5.000000e-01 : f32
    %79 = vector.broadcast %cst_45 : f32 to vector<8x8xf32>
    %80 = arith.mulf %79, %78 : vector<8x8xf32>
    %cst_46 = arith.constant dense<0.000000e+00> : vector<8x8xf32>
    %81 = tpu.matmul %75, %80, %cst_46 {dimension_numbers = #tpu.dot_dimension_numbers<[1], [0], [0], [1], [0, 0, 1, 1], [], []>} : vector<8x8xf32>, vector<8x8xf32>, vector<8x8xf32> -> vector<8x8xf32>
    %cst_47 = arith.constant dense<0.000000e+00> : vector<8x8xf32>
    %82 = tpu.matmul %80, %76, %cst_47 {dimension_numbers = #tpu.dot_dimension_numbers<[1], [0], [0], [1], [0, 0, 1, 1], [], []>} : vector<8x8xf32>, vector<8x8xf32>, vector<8x8xf32> -> vector<8x8xf32>
    %cst_48 = arith.constant dense<0.000000e+00> : vector<8x8xf32>
    %83 = tpu.matmul %82, %81, %cst_48 {dimension_numbers = #tpu.dot_dimension_numbers<[1], [0], [0], [1], [0, 0, 1, 1], [], []>} : vector<8x8xf32>, vector<8x8xf32>, vector<8x8xf32> -> vector<8x8xf32>
    %84 = arith.subf %6, %83 : vector<8x8xf32>
    %cst_49 = arith.constant 5.000000e-01 : f32
    %85 = vector.broadcast %cst_49 : f32 to vector<8x8xf32>
    %86 = arith.mulf %85, %84 : vector<8x8xf32>
    %cst_50 = arith.constant dense<0.000000e+00> : vector<8x8xf32>
    %87 = tpu.matmul %81, %86, %cst_50 {dimension_numbers = #tpu.dot_dimension_numbers<[1], [0], [0], [1], [0, 0, 1, 1], [], []>} : vector<8x8xf32>, vector<8x8xf32>, vector<8x8xf32> -> vector<8x8xf32>
    %cst_51 = arith.constant dense<0.000000e+00> : vector<8x8xf32>
    %88 = tpu.matmul %86, %82, %cst_51 {dimension_numbers = #tpu.dot_dimension_numbers<[1], [0], [0], [1], [0, 0, 1, 1], [], []>} : vector<8x8xf32>, vector<8x8xf32>, vector<8x8xf32> -> vector<8x8xf32>
    %cst_52 = arith.constant dense<0.000000e+00> : vector<8x8xf32>
    %89 = tpu.matmul %88, %87, %cst_52 {dimension_numbers = #tpu.dot_dimension_numbers<[1], [0], [0], [1], [0, 0, 1, 1], [], []>} : vector<8x8xf32>, vector<8x8xf32>, vector<8x8xf32> -> vector<8x8xf32>
    %90 = arith.subf %6, %89 : vector<8x8xf32>
    %cst_53 = arith.constant 5.000000e-01 : f32
    %91 = vector.broadcast %cst_53 : f32 to vector<8x8xf32>
    %92 = arith.mulf %91, %90 : vector<8x8xf32>
    %cst_54 = arith.constant dense<0.000000e+00> : vector<8x8xf32>
    %93 = tpu.matmul %92, %88, %cst_54 {dimension_numbers = #tpu.dot_dimension_numbers<[1], [0], [0], [1], [0, 0, 1, 1], [], []>} : vector<8x8xf32>, vector<8x8xf32>, vector<8x8xf32> -> vector<8x8xf32>
    %94 = math.rsqrt %32 : vector<1x1xf32>
    %95 = vector.broadcast %94 : vector<1x1xf32> to vector<8x8xf32>
    %96 = arith.mulf %93, %95 : vector<8x8xf32>
    %cst_55 = arith.constant dense<0.000000e+00> : vector<8x8xf32>
    %97 = tpu.matmul %9, %96, %cst_55 {dimension_numbers = #tpu.dot_dimension_numbers<[1], [0], [0], [1], [0, 0, 1, 1], [], []>} : vector<8x8xf32>, vector<8x8xf32>, vector<8x8xf32> -> vector<8x8xf32>
    %cst_56 = arith.constant dense<0.000000e+00> : vector<8x1xf32>
    %98 = tpu.matmul %97, %20, %cst_56 {dimension_numbers = #tpu.dot_dimension_numbers<[1], [0], [0], [1], [0, 0, 1, 1], [], []>} : vector<8x8xf32>, vector<8x1xf32>, vector<8x1xf32> -> vector<8x1xf32>
    %99 = arith.subf %10, %98 : vector<8x1xf32>
    %cst_57 = arith.constant dense<0.000000e+00> : vector<8x256xf32>
    %100 = tpu.matmul %97, %16, %cst_57 {dimension_numbers = #tpu.dot_dimension_numbers<[1], [0], [0], [1], [0, 0, 1, 1], [], []>} : vector<8x8xf32>, vector<8x256xf32>, vector<8x256xf32> -> vector<8x256xf32>
    %101 = vector.broadcast %99 : vector<8x1xf32> to vector<8x256xf32>
    %102 = arith.addf %100, %101 : vector<8x256xf32>
    %103 = vector.extract_strided_slice %102 {offsets = [0, 0], sizes = [8, 128], strides = [1, 1]} : vector<8x256xf32> to vector<8x128xf32>
    %c0_58 = arith.constant 0 : index
    %c0_59 = arith.constant 0 : index
    %c0_60 = arith.constant 0 : index
    %104 = vector.load %arg4[%c0_58, %c0_59, %c0_60] : memref<4x8x128xf32, #tpu.memory_space<vmem>>, vector<1x8x128xf32>
    %105 = vector.shape_cast %104 : vector<1x8x128xf32> to vector<8x128xf32>
    %106 = vector.shape_cast %103 : vector<8x128xf32> to vector<1x8x128xf32>
    tpu.vector_store %arg4[%c0_58, %c0_59, %c0_60], %106 {strides = array<i32>} : memref<4x8x128xf32, #tpu.memory_space<vmem>>, vector<1x8x128xf32>,
    %107 = vector.extract_strided_slice %102 {offsets = [0, 128], sizes = [8, 128], strides = [1, 1]} : vector<8x256xf32> to vector<8x128xf32>
    %c1_61 = arith.constant 1 : index
    %c0_62 = arith.constant 0 : index
    %c0_63 = arith.constant 0 : index
    %108 = vector.load %arg4[%c1_61, %c0_62, %c0_63] : memref<4x8x128xf32, #tpu.memory_space<vmem>>, vector<1x8x128xf32>
    %109 = vector.shape_cast %108 : vector<1x8x128xf32> to vector<8x128xf32>
    %110 = vector.shape_cast %107 : vector<8x128xf32> to vector<1x8x128xf32>
    tpu.vector_store %arg4[%c1_61, %c0_62, %c0_63], %110 {strides = array<i32>} : memref<4x8x128xf32, #tpu.memory_space<vmem>>, vector<1x8x128xf32>,
    %c2 = arith.constant 2 : index
    %c0_64 = arith.constant 0 : index
    %c0_65 = arith.constant 0 : index
    %111 = vector.load %arg1[%c2, %c0_64, %c0_65] : memref<4x8x128xf32, #tpu.memory_space<vmem>>, vector<1x8x128xf32>
    %112 = vector.shape_cast %111 : vector<1x8x128xf32> to vector<8x128xf32>
    %c3 = arith.constant 3 : index
    %c0_66 = arith.constant 0 : index
    %c0_67 = arith.constant 0 : index
    %113 = vector.load %arg1[%c3, %c0_66, %c0_67] : memref<4x8x128xf32, #tpu.memory_space<vmem>>, vector<1x8x128xf32>
    %114 = vector.shape_cast %113 : vector<1x8x128xf32> to vector<8x128xf32>
    %115 = tpu.concatenate %112, %114 in 1 : vector<8x128xf32>, vector<8x128xf32> -> vector<8x256xf32>
    %cst_68 = arith.constant dense<0.000000e+00> : vector<8x8xf32>
    %116 = tpu.matmul %115, %115, %cst_68 {dimension_numbers = #tpu.dot_dimension_numbers<[1], [1], [0], [0], [0, 0, 1, 0], [], []>} : vector<8x256xf32>, vector<8x256xf32>, vector<8x8xf32> -> vector<8x8xf32>
    %cst_69 = arith.constant dense<0.000000e+00> : vector<8x1xf32>
    %117 = tpu.matmul %115, %11, %cst_69 {dimension_numbers = #tpu.dot_dimension_numbers<[1], [0], [0], [1], [0, 0, 1, 1], [], []>} : vector<8x256xf32>, vector<256x1xf32>, vector<8x1xf32> -> vector<8x1xf32>
    %cst_70 = arith.constant 7.812500e-03 : f32
    %118 = vector.broadcast %cst_70 : f32 to vector<8x1xf32>
    %119 = arith.mulf %117, %118 : vector<8x1xf32>
    %cst_71 = arith.constant dense<0.000000e+00> : vector<8x8xf32>
    %120 = tpu.matmul %119, %119, %cst_71 {dimension_numbers = #tpu.dot_dimension_numbers<[1], [1], [0], [0], [0, 0, 1, 0], [], []>} : vector<8x1xf32>, vector<8x1xf32>, vector<8x8xf32> -> vector<8x8xf32>
    %cst_72 = arith.constant 7.812500e-03 : f32
    %121 = vector.broadcast %cst_72 : f32 to vector<8x8xf32>
    %122 = arith.mulf %116, %121 : vector<8x8xf32>
    %123 = arith.subf %122, %120 : vector<8x8xf32>
    %124 = arith.addf %123, %8 : vector<8x8xf32>
    %125 = arith.mulf %124, %124 : vector<8x8xf32>
    %126 = vector.shape_cast %125 : vector<8x8xf32> to vector<1x8x8xf32>
    %cst_73 = arith.constant dense<0.000000e+00> : vector<1xf32>
    %127 = vector.multi_reduction <add>, %126, %cst_73 [1, 2] : vector<1x8x8xf32> to vector<1xf32>
    %128 = vector.shape_cast %127 : vector<1xf32> to vector<1x1x1xf32>
    %129 = vector.extract %128[0, 0, 0] : f32 from vector<1x1x1xf32>
    %130 = vector.broadcast %129 : f32 to vector<1x1xf32>
    %131 = math.sqrt %130 : vector<1x1xf32>
    %132 = vector.broadcast %131 : vector<1x1xf32> to vector<8x8xf32>
    %133 = arith.divf %124, %132 : vector<8x8xf32>
    %cst_74 = arith.constant dense<0.000000e+00> : vector<8x8xf32>
    %134 = tpu.matmul %4, %133, %cst_74 {dimension_numbers = #tpu.dot_dimension_numbers<[1], [0], [0], [1], [0, 0, 1, 1], [], []>} : vector<8x8xf32>, vector<8x8xf32>, vector<8x8xf32> -> vector<8x8xf32>
    %135 = arith.subf %6, %134 : vector<8x8xf32>
    %cst_75 = arith.constant 5.000000e-01 : f32
    %136 = vector.broadcast %cst_75 : f32 to vector<8x8xf32>
    %137 = arith.mulf %136, %135 : vector<8x8xf32>
    %cst_76 = arith.constant dense<0.000000e+00> : vector<8x8xf32>
    %138 = tpu.matmul %133, %137, %cst_76 {dimension_numbers = #tpu.dot_dimension_numbers<[1], [0], [0], [1], [0, 0, 1, 1], [], []>} : vector<8x8xf32>, vector<8x8xf32>, vector<8x8xf32> -> vector<8x8xf32>
    %cst_77 = arith.constant dense<0.000000e+00> : vector<8x8xf32>
    %139 = tpu.matmul %137, %4, %cst_77 {dimension_numbers = #tpu.dot_dimension_numbers<[1], [0], [0], [1], [0, 0, 1, 1], [], []>} : vector<8x8xf32>, vector<8x8xf32>, vector<8x8xf32> -> vector<8x8xf32>
    %cst_78 = arith.constant dense<0.000000e+00> : vector<8x8xf32>
    %140 = tpu.matmul %139, %138, %cst_78 {dimension_numbers = #tpu.dot_dimension_numbers<[1], [0], [0], [1], [0, 0, 1, 1], [], []>} : vector<8x8xf32>, vector<8x8xf32>, vector<8x8xf32> -> vector<8x8xf32>
    %141 = arith.subf %6, %140 : vector<8x8xf32>
    %cst_79 = arith.constant 5.000000e-01 : f32
    %142 = vector.broadcast %cst_79 : f32 to vector<8x8xf32>
    %143 = arith.mulf %142, %141 : vector<8x8xf32>
    %cst_80 = arith.constant dense<0.000000e+00> : vector<8x8xf32>
    %144 = tpu.matmul %138, %143, %cst_80 {dimension_numbers = #tpu.dot_dimension_numbers<[1], [0], [0], [1], [0, 0, 1, 1], [], []>} : vector<8x8xf32>, vector<8x8xf32>, vector<8x8xf32> -> vector<8x8xf32>
    %cst_81 = arith.constant dense<0.000000e+00> : vector<8x8xf32>
    %145 = tpu.matmul %143, %139, %cst_81 {dimension_numbers = #tpu.dot_dimension_numbers<[1], [0], [0], [1], [0, 0, 1, 1], [], []>} : vector<8x8xf32>, vector<8x8xf32>, vector<8x8xf32> -> vector<8x8xf32>
    %cst_82 = arith.constant dense<0.000000e+00> : vector<8x8xf32>
    %146 = tpu.matmul %145, %144, %cst_82 {dimension_numbers = #tpu.dot_dimension_numbers<[1], [0], [0], [1], [0, 0, 1, 1], [], []>} : vector<8x8xf32>, vector<8x8xf32>, vector<8x8xf32> -> vector<8x8xf32>
    %147 = arith.subf %6, %146 : vector<8x8xf32>
    %cst_83 = arith.constant 5.000000e-01 : f32
    %148 = vector.broadcast %cst_83 : f32 to vector<8x8xf32>
    %149 = arith.mulf %148, %147 : vector<8x8xf32>
    %cst_84 = arith.constant dense<0.000000e+00> : vector<8x8xf32>
    %150 = tpu.matmul %144, %149, %cst_84 {dimension_numbers = #tpu.dot_dimension_numbers<[1], [0], [0], [1], [0, 0, 1, 1], [], []>} : vector<8x8xf32>, vector<8x8xf32>, vector<8x8xf32> -> vector<8x8xf32>
    %cst_85 = arith.constant dense<0.000000e+00> : vector<8x8xf32>
    %151 = tpu.matmul %149, %145, %cst_85 {dimension_numbers = #tpu.dot_dimension_numbers<[1], [0], [0], [1], [0, 0, 1, 1], [], []>} : vector<8x8xf32>, vector<8x8xf32>, vector<8x8xf32> -> vector<8x8xf32>
    %cst_86 = arith.constant dense<0.000000e+00> : vector<8x8xf32>
    %152 = tpu.matmul %151, %150, %cst_86 {dimension_numbers = #tpu.dot_dimension_numbers<[1], [0], [0], [1], [0, 0, 1, 1], [], []>} : vector<8x8xf32>, vector<8x8xf32>, vector<8x8xf32> -> vector<8x8xf32>
    %153 = arith.subf %6, %152 : vector<8x8xf32>
    %cst_87 = arith.constant 5.000000e-01 : f32
    %154 = vector.broadcast %cst_87 : f32 to vector<8x8xf32>
    %155 = arith.mulf %154, %153 : vector<8x8xf32>
    %cst_88 = arith.constant dense<0.000000e+00> : vector<8x8xf32>
    %156 = tpu.matmul %150, %155, %cst_88 {dimension_numbers = #tpu.dot_dimension_numbers<[1], [0], [0], [1], [0, 0, 1, 1], [], []>} : vector<8x8xf32>, vector<8x8xf32>, vector<8x8xf32> -> vector<8x8xf32>
    %cst_89 = arith.constant dense<0.000000e+00> : vector<8x8xf32>
    %157 = tpu.matmul %155, %151, %cst_89 {dimension_numbers = #tpu.dot_dimension_numbers<[1], [0], [0], [1], [0, 0, 1, 1], [], []>} : vector<8x8xf32>, vector<8x8xf32>, vector<8x8xf32> -> vector<8x8xf32>
    %cst_90 = arith.constant dense<0.000000e+00> : vector<8x8xf32>
    %158 = tpu.matmul %157, %156, %cst_90 {dimension_numbers = #tpu.dot_dimension_numbers<[1], [0], [0], [1], [0, 0, 1, 1], [], []>} : vector<8x8xf32>, vector<8x8xf32>, vector<8x8xf32> -> vector<8x8xf32>
    %159 = arith.subf %6, %158 : vector<8x8xf32>
    %cst_91 = arith.constant 5.000000e-01 : f32
    %160 = vector.broadcast %cst_91 : f32 to vector<8x8xf32>
    %161 = arith.mulf %160, %159 : vector<8x8xf32>
    %cst_92 = arith.constant dense<0.000000e+00> : vector<8x8xf32>
    %162 = tpu.matmul %156, %161, %cst_92 {dimension_numbers = #tpu.dot_dimension_numbers<[1], [0], [0], [1], [0, 0, 1, 1], [], []>} : vector<8x8xf32>, vector<8x8xf32>, vector<8x8xf32> -> vector<8x8xf32>
    %cst_93 = arith.constant dense<0.000000e+00> : vector<8x8xf32>
    %163 = tpu.matmul %161, %157, %cst_93 {dimension_numbers = #tpu.dot_dimension_numbers<[1], [0], [0], [1], [0, 0, 1, 1], [], []>} : vector<8x8xf32>, vector<8x8xf32>, vector<8x8xf32> -> vector<8x8xf32>
    %cst_94 = arith.constant dense<0.000000e+00> : vector<8x8xf32>
    %164 = tpu.matmul %163, %162, %cst_94 {dimension_numbers = #tpu.dot_dimension_numbers<[1], [0], [0], [1], [0, 0, 1, 1], [], []>} : vector<8x8xf32>, vector<8x8xf32>, vector<8x8xf32> -> vector<8x8xf32>
    %165 = arith.subf %6, %164 : vector<8x8xf32>
    %cst_95 = arith.constant 5.000000e-01 : f32
    %166 = vector.broadcast %cst_95 : f32 to vector<8x8xf32>
    %167 = arith.mulf %166, %165 : vector<8x8xf32>
    %cst_96 = arith.constant dense<0.000000e+00> : vector<8x8xf32>
    %168 = tpu.matmul %162, %167, %cst_96 {dimension_numbers = #tpu.dot_dimension_numbers<[1], [0], [0], [1], [0, 0, 1, 1], [], []>} : vector<8x8xf32>, vector<8x8xf32>, vector<8x8xf32> -> vector<8x8xf32>
    %cst_97 = arith.constant dense<0.000000e+00> : vector<8x8xf32>
    %169 = tpu.matmul %167, %163, %cst_97 {dimension_numbers = #tpu.dot_dimension_numbers<[1], [0], [0], [1], [0, 0, 1, 1], [], []>} : vector<8x8xf32>, vector<8x8xf32>, vector<8x8xf32> -> vector<8x8xf32>
    %cst_98 = arith.constant dense<0.000000e+00> : vector<8x8xf32>
    %170 = tpu.matmul %169, %168, %cst_98 {dimension_numbers = #tpu.dot_dimension_numbers<[1], [0], [0], [1], [0, 0, 1, 1], [], []>} : vector<8x8xf32>, vector<8x8xf32>, vector<8x8xf32> -> vector<8x8xf32>
    %171 = arith.subf %6, %170 : vector<8x8xf32>
    %cst_99 = arith.constant 5.000000e-01 : f32
    %172 = vector.broadcast %cst_99 : f32 to vector<8x8xf32>
    %173 = arith.mulf %172, %171 : vector<8x8xf32>
    %cst_100 = arith.constant dense<0.000000e+00> : vector<8x8xf32>
    %174 = tpu.matmul %168, %173, %cst_100 {dimension_numbers = #tpu.dot_dimension_numbers<[1], [0], [0], [1], [0, 0, 1, 1], [], []>} : vector<8x8xf32>, vector<8x8xf32>, vector<8x8xf32> -> vector<8x8xf32>
    %cst_101 = arith.constant dense<0.000000e+00> : vector<8x8xf32>
    %175 = tpu.matmul %173, %169, %cst_101 {dimension_numbers = #tpu.dot_dimension_numbers<[1], [0], [0], [1], [0, 0, 1, 1], [], []>} : vector<8x8xf32>, vector<8x8xf32>, vector<8x8xf32> -> vector<8x8xf32>
    %cst_102 = arith.constant dense<0.000000e+00> : vector<8x8xf32>
    %176 = tpu.matmul %175, %174, %cst_102 {dimension_numbers = #tpu.dot_dimension_numbers<[1], [0], [0], [1], [0, 0, 1, 1], [], []>} : vector<8x8xf32>, vector<8x8xf32>, vector<8x8xf32> -> vector<8x8xf32>
    %177 = arith.subf %6, %176 : vector<8x8xf32>
    %cst_103 = arith.constant 5.000000e-01 : f32
    %178 = vector.broadcast %cst_103 : f32 to vector<8x8xf32>
    %179 = arith.mulf %178, %177 : vector<8x8xf32>
    %cst_104 = arith.constant dense<0.000000e+00> : vector<8x8xf32>
    %180 = tpu.matmul %174, %179, %cst_104 {dimension_numbers = #tpu.dot_dimension_numbers<[1], [0], [0], [1], [0, 0, 1, 1], [], []>} : vector<8x8xf32>, vector<8x8xf32>, vector<8x8xf32> -> vector<8x8xf32>
    %cst_105 = arith.constant dense<0.000000e+00> : vector<8x8xf32>
    %181 = tpu.matmul %179, %175, %cst_105 {dimension_numbers = #tpu.dot_dimension_numbers<[1], [0], [0], [1], [0, 0, 1, 1], [], []>} : vector<8x8xf32>, vector<8x8xf32>, vector<8x8xf32> -> vector<8x8xf32>
    %cst_106 = arith.constant dense<0.000000e+00> : vector<8x8xf32>
    %182 = tpu.matmul %181, %180, %cst_106 {dimension_numbers = #tpu.dot_dimension_numbers<[1], [0], [0], [1], [0, 0, 1, 1], [], []>} : vector<8x8xf32>, vector<8x8xf32>, vector<8x8xf32> -> vector<8x8xf32>
    %183 = arith.subf %6, %182 : vector<8x8xf32>
    %cst_107 = arith.constant 5.000000e-01 : f32
    %184 = vector.broadcast %cst_107 : f32 to vector<8x8xf32>
    %185 = arith.mulf %184, %183 : vector<8x8xf32>
    %cst_108 = arith.constant dense<0.000000e+00> : vector<8x8xf32>
    %186 = tpu.matmul %180, %185, %cst_108 {dimension_numbers = #tpu.dot_dimension_numbers<[1], [0], [0], [1], [0, 0, 1, 1], [], []>} : vector<8x8xf32>, vector<8x8xf32>, vector<8x8xf32> -> vector<8x8xf32>
    %cst_109 = arith.constant dense<0.000000e+00> : vector<8x8xf32>
    %187 = tpu.matmul %185, %181, %cst_109 {dimension_numbers = #tpu.dot_dimension_numbers<[1], [0], [0], [1], [0, 0, 1, 1], [], []>} : vector<8x8xf32>, vector<8x8xf32>, vector<8x8xf32> -> vector<8x8xf32>
    %cst_110 = arith.constant dense<0.000000e+00> : vector<8x8xf32>
    %188 = tpu.matmul %187, %186, %cst_110 {dimension_numbers = #tpu.dot_dimension_numbers<[1], [0], [0], [1], [0, 0, 1, 1], [], []>} : vector<8x8xf32>, vector<8x8xf32>, vector<8x8xf32> -> vector<8x8xf32>
    %189 = arith.subf %6, %188 : vector<8x8xf32>
    %cst_111 = arith.constant 5.000000e-01 : f32
    %190 = vector.broadcast %cst_111 : f32 to vector<8x8xf32>
    %191 = arith.mulf %190, %189 : vector<8x8xf32>
    %cst_112 = arith.constant dense<0.000000e+00> : vector<8x8xf32>
    %192 = tpu.matmul %191, %187, %cst_112 {dimension_numbers = #tpu.dot_dimension_numbers<[1], [0], [0], [1], [0, 0, 1, 1], [], []>} : vector<8x8xf32>, vector<8x8xf32>, vector<8x8xf32> -> vector<8x8xf32>
    %193 = math.rsqrt %131 : vector<1x1xf32>
    %194 = vector.broadcast %193 : vector<1x1xf32> to vector<8x8xf32>
    %195 = arith.mulf %192, %194 : vector<8x8xf32>
    %cst_113 = arith.constant dense<0.000000e+00> : vector<8x8xf32>
    %196 = tpu.matmul %9, %195, %cst_113 {dimension_numbers = #tpu.dot_dimension_numbers<[1], [0], [0], [1], [0, 0, 1, 1], [], []>} : vector<8x8xf32>, vector<8x8xf32>, vector<8x8xf32> -> vector<8x8xf32>
    %cst_114 = arith.constant dense<0.000000e+00> : vector<8x1xf32>
    %197 = tpu.matmul %196, %119, %cst_114 {dimension_numbers = #tpu.dot_dimension_numbers<[1], [0], [0], [1], [0, 0, 1, 1], [], []>} : vector<8x8xf32>, vector<8x1xf32>, vector<8x1xf32> -> vector<8x1xf32>
    %198 = arith.subf %10, %197 : vector<8x1xf32>
    %cst_115 = arith.constant dense<0.000000e+00> : vector<8x256xf32>
    %199 = tpu.matmul %196, %115, %cst_115 {dimension_numbers = #tpu.dot_dimension_numbers<[1], [0], [0], [1], [0, 0, 1, 1], [], []>} : vector<8x8xf32>, vector<8x256xf32>, vector<8x256xf32> -> vector<8x256xf32>
    %200 = vector.broadcast %198 : vector<8x1xf32> to vector<8x256xf32>
    %201 = arith.addf %199, %200 : vector<8x256xf32>
    %202 = vector.extract_strided_slice %201 {offsets = [0, 0], sizes = [8, 128], strides = [1, 1]} : vector<8x256xf32> to vector<8x128xf32>
    %c2_116 = arith.constant 2 : index
    %c0_117 = arith.constant 0 : index
    %c0_118 = arith.constant 0 : index
    %203 = vector.load %arg4[%c2_116, %c0_117, %c0_118] : memref<4x8x128xf32, #tpu.memory_space<vmem>>, vector<1x8x128xf32>
    %204 = vector.shape_cast %203 : vector<1x8x128xf32> to vector<8x128xf32>
    %205 = vector.shape_cast %202 : vector<8x128xf32> to vector<1x8x128xf32>
    tpu.vector_store %arg4[%c2_116, %c0_117, %c0_118], %205 {strides = array<i32>} : memref<4x8x128xf32, #tpu.memory_space<vmem>>, vector<1x8x128xf32>,
    %206 = vector.extract_strided_slice %201 {offsets = [0, 128], sizes = [8, 128], strides = [1, 1]} : vector<8x256xf32> to vector<8x128xf32>
    %c3_119 = arith.constant 3 : index
    %c0_120 = arith.constant 0 : index
    %c0_121 = arith.constant 0 : index
    %207 = vector.load %arg4[%c3_119, %c0_120, %c0_121] : memref<4x8x128xf32, #tpu.memory_space<vmem>>, vector<1x8x128xf32>
    %208 = vector.shape_cast %207 : vector<1x8x128xf32> to vector<8x128xf32>
    %209 = vector.shape_cast %206 : vector<8x128xf32> to vector<1x8x128xf32>
    tpu.vector_store %arg4[%c3_119, %c0_120, %c0_121], %209 {strides = array<i32>} : memref<4x8x128xf32, #tpu.memory_space<vmem>>, vector<1x8x128xf32>,
    return
  }
  func.func @transform_0(%arg0: i32) -> (i32, i32, i32) {
    %c0_i32 = arith.constant 0 : i32
    %c0_i32_0 = arith.constant 0 : i32
    %c0_i32_1 = arith.constant 0 : i32
    return %arg0, %c0_i32, %c0_i32_0 : i32, i32, i32
  }
  func.func @transform_1(%arg0: i32) -> (i32, i32) {
    %c0_i32 = arith.constant 0 : i32
    %c0_i32_0 = arith.constant 0 : i32
    %c0_i32_1 = arith.constant 0 : i32
    return %c0_i32, %c0_i32_0 : i32, i32
  }
  func.func @transform_2(%arg0: i32) -> (i32, i32) {
    %c0_i32 = arith.constant 0 : i32
    %c0_i32_0 = arith.constant 0 : i32
    %c0_i32_1 = arith.constant 0 : i32
    return %c0_i32, %c0_i32_0 : i32, i32
  }
  func.func @transform_3(%arg0: i32) -> (i32, i32, i32) {
    %c0_i32 = arith.constant 0 : i32
    %c0_i32_0 = arith.constant 0 : i32
    %c0_i32_1 = arith.constant 0 : i32
    return %arg0, %c0_i32, %c0_i32_0 : i32, i32, i32
  }
}

</mosaic_0001>

<llo_original>
// kernel: tpu_custom_call.1
$region0: #{tpu_custom_call.1}
  #allocation0 [shape = 'u32[]', space=smem, size = 0x4, offset = 0x4, fixed_abs, tag = 'smem constant byte address 0x4 - core index']
  #allocation1 [shape = 'u32[72,128]{1,0:T(1,128)}', space=vmem, size = 0x9000, scoped, tag = 'internal scratch']
  %s0 = inlined_call_operand.hbm [shape: f32[4,8,128], index: 0, kind: input, shape index: {}]
  %s1 = inlined_call_operand.vmem [shape: f32[8,8], index: 1, kind: input, shape index: {}]
  %s2 = inlined_call_operand.vmem [shape: f32[8,1], index: 2, kind: input, shape index: {}]
  %s3 = inlined_call_operand.hbm [shape: f32[4,8,128], index: 3, kind: output, shape index: {}]
  %s4 = sld [smem:[#allocation0]]
  $region26: #{tpu_custom_call.1} parent=0
    _
  %s6 = ssub.s32 1, %s4
  %s7 = scalar_select 0, %s6, %s4
  $region1: #{tpu_custom_call.1} parent=0
    #allocation2 [shape = 'u8[16384]{0}', space=vmem, size = 0x4000, scoped, tag = 'input window, operand 0, single buffered']
    #allocation3 [shape = 's32[1]{0}', space=sflag, size = 0x4, scoped, tag = 'scoped memory for tpu_custom_call.1']
    #allocation4 [shape = 's32[1]{0}', space=sflag, size = 0x4, scoped, tag = 'scoped memory for tpu_custom_call.1']
    #allocation5 [shape = 'u8[16384]{0}', space=vmem, size = 0x4000, scoped, tag = 'output window, operand 0, single buffered']
    %8 = vsyncpa [#allocation3], 0
    %9 = vsyncpa [#allocation4], 0
    // Predicated region
    $region2: #{tpu_custom_call.1} parent=1 // pred_check
      _
    $region3: #{tpu_custom_call.1} parent=1 // pred_check_branch
      %11 = sbr.rel (0) target = $region5
    $region4: #{tpu_custom_call.1} parent=1 // pred_region
      %13 = vsyncadd [#allocation3], 0
      %s14 = sshll.u32 %s0, 4
      %s15 = int_to_ptr.hbm [resolvable:$true] %s14
      %s16 = sshll.u32 [#allocation2], 4
      %s17 = int_to_ptr.vmem [resolvable:$true] %s16
      %22 = dma.hbm_to_vmem [thread:$0]  %s15, 512, %s17, [#allocation3], 128, 128, 8
    $region5: #{tpu_custom_call.1} parent=1 // pred_fallthru
      _
    // Predicated region
    $region6: #{tpu_custom_call.1} parent=1 // pred_check
      _
    $region7: #{tpu_custom_call.1} parent=1 // pred_check_branch
      %24 = sbr.rel (0) target = $region9
    $region8: #{tpu_custom_call.1} parent=1 // pred_region
      _
    $region9: #{tpu_custom_call.1} parent=1 // pred_fallthru
      _
    // Predicated region
    $region10: #{tpu_custom_call.1} parent=1 // pred_check
      _
    $region11: #{tpu_custom_call.1} parent=1 // pred_check_branch
      %26 = sbr.rel (0) target = $region13
    $region12: #{tpu_custom_call.1} parent=1 // pred_region
      _
    $region13: #{tpu_custom_call.1} parent=1 // pred_fallthru
      _
    // Predicated region
    $region14: #{tpu_custom_call.1} parent=1 // pred_check
      _
    $region15: #{tpu_custom_call.1} parent=1 // pred_check_branch
      %28 = sbr.rel (0) target = $region17
    $region16: #{tpu_custom_call.1} parent=1 // pred_region
      %30 = dma.done [#allocation3], 512
    $region17: #{tpu_custom_call.1} parent=1 // pred_fallthru
      _
    %v31 = vlaneseq
    %v32 = vshrl.u32 %v31, 7
    %v33 = vlaneseq
    %v34 = vand.u32 %v33, 127
    %vm35 = vcmp.eq.s32.totalorder %v32, %v34
    %v36 = vsel %vm35, 1, 0
    %v37 = vcvt.s32.f32 %v36
    %v38 = vmul.f32 %v37, 3.0
    %v39 = vmul.f32 %v37, 1e-05
    %v40 = vld [vmem:[%s1] sm:$0xff]
    %v41 = vld [vmem:[%s2] sm:$0xff]
    %v42 = vld [vmem:[#allocation2] sm:$0xff]
    %s43 = scalar_lea.vmem [#allocation2], 8
    %v44 = vld [vmem:[%s43] sm:$0xff]
    %45 = vmatpush.xpose.msra.mxu0 0.0
    %46 = vmatpush.xpose.msra.mxu0 0.0
    %47 = vmatpush.xpose.msra.mxu0 0.0
    %48 = vmatpush.xpose.msra.mxu0 0.0
    %49 = vmatpush.xpose.msra.mxu0 0.0
    %50 = vmatpush.xpose.msra.mxu0 0.0
    %51 = vmatpush.xpose.msra.mxu0 0.0
    %52 = vmatpush.xpose.msra.mxu0 0.0
    %53 = vmatpush.xpose.msra.mxu0 0.0
    %54 = vmatpush.xpose.msra.mxu0 0.0
    %55 = vmatpush.xpose.msra.mxu0 0.0
    %56 = vmatpush.xpose.msra.mxu0 0.0
    %57 = vmatpush.xpose.msra.mxu0 0.0
    %58 = vmatpush.xpose.msra.mxu0 0.0
    %59 = vmatpush.xpose.msra.mxu0 0.0
    %60 = vmatpush.xpose.msra.mxu0 %v42
    %61 = vmatmul.f32.gmra.mxu0 %v42
    %v62 = vpop.f32.mrf.mxu0
    %v63 = vadd.f32 0.0, %v62
    %64 = vdwg.mxu0
    %65 = vmatpush.xpose.msra.mxu0 0.0
    %66 = vmatpush.xpose.msra.mxu0 0.0
    %67 = vmatpush.xpose.msra.mxu0 0.0
    %68 = vmatpush.xpose.msra.mxu0 0.0
    %69 = vmatpush.xpose.msra.mxu0 0.0
    %70 = vmatpush.xpose.msra.mxu0 0.0
    %71 = vmatpush.xpose.msra.mxu0 0.0
    %72 = vmatpush.xpose.msra.mxu0 0.0
    %73 = vmatpush.xpose.msra.mxu0 0.0
    %74 = vmatpush.xpose.msra.mxu0 0.0
    %75 = vmatpush.xpose.msra.mxu0 0.0
    %76 = vmatpush.xpose.msra.mxu0 0.0
    %77 = vmatpush.xpose.msra.mxu0 0.0
    %78 = vmatpush.xpose.msra.mxu0 0.0
    %79 = vmatpush.xpose.msra.mxu0 0.0
    %80 = vmatpush.xpose.msra.mxu0 %v44
    %81 = vmatmul.f32.gmra.mxu0 %v44
    %v82 = vpop.f32.mrf.mxu0
    %v83 = vadd.f32 %v63, %v82
    %84 = vdwg.mxu0
    %85 = vmatpush.msra.mxu0 1.0
    %86 = vmatpush.msra.mxu0 1.0
    %87 = vmatpush.msra.mxu0 1.0
    %88 = vmatpush.msra.mxu0 1.0
    %89 = vmatpush.msra.mxu0 1.0
    %90 = vmatpush.msra.mxu0 1.0
    %91 = vmatpush.msra.mxu0 1.0
    %92 = vmatpush.msra.mxu0 1.0
    %93 = vmatpush.msra.mxu0 1.0
    %94 = vmatpush.msra.mxu0 1.0
    %95 = vmatpush.msra.mxu0 1.0
    %96 = vmatpush.msra.mxu0 1.0
    %97 = vmatpush.msra.mxu0 1.0
    %98 = vmatpush.msra.mxu0 1.0
    %99 = vmatpush.msra.mxu0 1.0
    %100 = vmatpush.msra.mxu0 1.0
    %101 = vmatmul.f32.gmra.mxu0 %v42
    %v102 = vpop.f32.mrf.mxu0
    %v103 = vadd.f32 0.0, %v102
    %104 = vdwg.mxu0
    %105 = vmatpush.msra.mxu0 1.0
    %106 = vmatpush.msra.mxu0 1.0
    %107 = vmatpush.msra.mxu0 1.0
    %108 = vmatpush.msra.mxu0 1.0
    %109 = vmatpush.msra.mxu0 1.0
    %110 = vmatpush.msra.mxu0 1.0
    %111 = vmatpush.msra.mxu0 1.0
    %112 = vmatpush.msra.mxu0 1.0
    %113 = vmatpush.msra.mxu0 1.0
    %114 = vmatpush.msra.mxu0 1.0
    %115 = vmatpush.msra.mxu0 1.0
    %116 = vmatpush.msra.mxu0 1.0
    %117 = vmatpush.msra.mxu0 1.0
    %118 = vmatpush.msra.mxu0 1.0
    %119 = vmatpush.msra.mxu0 1.0
    %120 = vmatpush.msra.mxu0 1.0
    %121 = vmatmul.f32.gmra.mxu0 %v44
    %v122 = vpop.f32.mrf.mxu0
    %v123 = vadd.f32 %v103, %v122
    %124 = vdwg.mxu0
    %v125 = vmul.f32 %v123, 0.0078125
    %vm126 = vcmask 7168
    %v128 = vsel %vm126, %v125, 0
    %130 = vmatpush.xpose.msra.mxu0 0.0
    %131 = vmatpush.xpose.msra.mxu0 0.0
    %132 = vmatpush.xpose.msra.mxu0 0.0
    %133 = vmatpush.xpose.msra.mxu0 0.0
    %134 = vmatpush.xpose.msra.mxu0 0.0
    %135 = vmatpush.xpose.msra.mxu0 0.0
    %136 = vmatpush.xpose.msra.mxu0 0.0
    %137 = vmatpush.xpose.msra.mxu0 0.0
    %138 = vmatpush.xpose.msra.mxu0 0.0
    %139 = vmatpush.xpose.msra.mxu0 0.0
    %140 = vmatpush.xpose.msra.mxu0 0.0
    %141 = vmatpush.xpose.msra.mxu0 0.0
    %142 = vmatpush.xpose.msra.mxu0 0.0
    %143 = vmatpush.xpose.msra.mxu0 0.0
    %144 = vmatpush.xpose.msra.mxu0 0.0
    %145 = vmatpush.xpose.msra.mxu0 %v128
    %146 = vmatmul.f32.gmra.mxu0 %v128
    %v147 = vpop.f32.mrf.mxu0
    %v148 = vadd.f32 0.0, %v147
    %149 = vdwg.mxu0
    %v150 = vmul.f32 %v83, 0.0078125
    %v151 = vsub.f32 %v150, %v148
    %v152 = vadd.f32 %v151, %v39
    %v153 = vmul.f32 %v152, %v152
    %vm154 = vcmask 64512
    %v155 = vsel %vm154, %v153, 0.0
    %156 = vadd.xlane.f32.xlu0 %v155
    %v157 = vpop.xlane.xlu0 %156
    %v158 = vrot.slane %v157, 4
    %v159 = vadd.f32 %v157, %v158
    %v160 = vrot.slane %v159, 2
    %v161 = vadd.f32 %v159, %v160
    %v162 = vrot.slane %v161, 1
    %v163 = vadd.f32 %v161, %v162
    %s164 = vtos %v163
    %v165 = vstv %s164
    %v166 = vrsqrt.pop %v165
    %v167 = vmul.f32 %v166, %v165
    %v168 = vmul.f32 %v167, %v166
    %v169 = vmul.f32 0.5, %v168
    %v170 = vsub.f32 1.5, %v169
    %v171 = vmul.f32 %v166, %v170
    %v172 = vmul.f32 %v165, %v171
    %vm173 = vcmp.eq.f32.partialorder %v165, inf
    %v174 = vsel %vm173, %v165, %v172
    %vm175 = vcmp.eq.f32.partialorder %v165, 0.0
    %v176 = vand.u32 %v165, 2147483648
    %v177 = vsel %vm175, %v176, %v174
    %v178 = vrcp.pop %v177
    %v179 = vmul.f32 %v177, %v178
    %v180 = vsub.f32 1.0, %v179
    %v181 = vmul.f32 %v178, %v180
    %v182 = vadd.f32 %v178, %v181
    %vm183 = vweird.f32 %v177
    %vm184 = vweird.f32 %v178
    %vm185 = vmor %vm183, %vm184
    %v186 = vsel %vm185, %v178, %v182
    %v187 = vand.u32 2147483647, %v177
    %vm188 = vcmp.eq.f32.partialorder %v187, 8.507059e+37
    %v189 = vand.u32 %v177, 2147483648
    %v190 = vor.u32 1.1754944e-38, %v189
    %v191 = vsel %vm188, %v190, %v186
    %v192 = vmul.f32 %v152, %v191
    %v194 = vsel %vm154, %v37, 0
    %196 = vmatpush.msra.mxu0 0.0
    %197 = vmatpush.msra.mxu0 0.0
    %198 = vmatpush.msra.mxu0 0.0
    %199 = vmatpush.msra.mxu0 0.0
    %200 = vmatpush.msra.mxu0 0.0
    %201 = vmatpush.msra.mxu0 0.0
    %202 = vmatpush.msra.mxu0 0.0
    %203 = vmatpush.msra.mxu0 0.0
    %204 = vmatpush.msra.mxu0 0.0
    %205 = vmatpush.msra.mxu0 0.0
    %206 = vmatpush.msra.mxu0 0.0
    %207 = vmatpush.msra.mxu0 0.0
    %208 = vmatpush.msra.mxu0 0.0
    %209 = vmatpush.msra.mxu0 0.0
    %210 = vmatpush.msra.mxu0 0.0
    %211 = vmatpush.msra.mxu0 %v192
    %212 = vmatmul.f32.gmra.mxu0 %v194
    %v213 = vpop.f32.mrf.mxu0
    %v214 = vadd.f32 0.0, %v213
    %215 = vdwg.mxu0
    %v216 = vsub.f32 %v38, %v214
    %v217 = vmul.f32 %v216, 0.5
    %v219 = vsel %vm154, %v192, 0
    %221 = vmatpush.msra.mxu0 0.0
    %222 = vmatpush.msra.mxu0 0.0
    %223 = vmatpush.msra.mxu0 0.0
    %224 = vmatpush.msra.mxu0 0.0
    %225 = vmatpush.msra.mxu0 0.0
    %226 = vmatpush.msra.mxu0 0.0
    %227 = vmatpush.msra.mxu0 0.0
    %228 = vmatpush.msra.mxu0 0.0
    %229 = vmatpush.msra.mxu0 0.0
    %230 = vmatpush.msra.mxu0 0.0
    %231 = vmatpush.msra.mxu0 0.0
    %232 = vmatpush.msra.mxu0 0.0
    %233 = vmatpush.msra.mxu0 0.0
    %234 = vmatpush.msra.mxu0 0.0
    %235 = vmatpush.msra.mxu0 0.0
    %236 = vmatpush.msra.mxu0 %v217
    %237 = vmatmul.f32.gmra.mxu0 %v219
    %v238 = vpop.f32.mrf.mxu0
    %v239 = vadd.f32 0.0, %v238
    %240 = vdwg.mxu0
    %v242 = vsel %vm154, %v217, 0
    %244 = vmatpush.msra.mxu0 0.0
    %245 = vmatpush.msra.mxu0 0.0
    %246 = vmatpush.msra.mxu0 0.0
    %247 = vmatpush.msra.mxu0 0.0
    %248 = vmatpush.msra.mxu0 0.0
    %249 = vmatpush.msra.mxu0 0.0
    %250 = vmatpush.msra.mxu0 0.0
    %251 = vmatpush.msra.mxu0 0.0
    %252 = vmatpush.msra.mxu0 0.0
    %253 = vmatpush.msra.mxu0 0.0
    %254 = vmatpush.msra.mxu0 0.0
    %255 = vmatpush.msra.mxu0 0.0
    %256 = vmatpush.msra.mxu0 0.0
    %257 = vmatpush.msra.mxu0 0.0
    %258 = vmatpush.msra.mxu0 0.0
    %259 = vmatpush.msra.mxu0 %v37
    %260 = vmatmul.f32.gmra.mxu0 %v242
    %v261 = vpop.f32.mrf.mxu0
    %v262 = vadd.f32 0.0, %v261
    %263 = vdwg.mxu0
    %v265 = vsel %vm154, %v262, 0
    %267 = vmatpush.msra.mxu0 0.0
    %268 = vmatpush.msra.mxu0 0.0
    %269 = vmatpush.msra.mxu0 0.0
    %270 = vmatpush.msra.mxu0 0.0
    %271 = vmatpush.msra.mxu0 0.0
    %272 = vmatpush.msra.mxu0 0.0
    %273 = vmatpush.msra.mxu0 0.0
    %274 = vmatpush.msra.mxu0 0.0
    %275 = vmatpush.msra.mxu0 0.0
    %276 = vmatpush.msra.mxu0 0.0
    %277 = vmatpush.msra.mxu0 0.0
    %278 = vmatpush.msra.mxu0 0.0
    %279 = vmatpush.msra.mxu0 0.0
    %280 = vmatpush.msra.mxu0 0.0
    %281 = vmatpush.msra.mxu0 0.0
    %282 = vmatpush.msra.mxu0 %v239
    %283 = vmatmul.f32.gmra.mxu0 %v265
    %v284 = vpop.f32.mrf.mxu0
    %v285 = vadd.f32 0.0, %v284
    %286 = vdwg.mxu0
    %v287 = vsub.f32 %v38, %v285
    %v288 = vmul.f32 %v287, 0.5
    %v290 = vsel %vm154, %v239, 0
    %292 = vmatpush.msra.mxu0 0.0
    %293 = vmatpush.msra.mxu0 0.0
    %294 = vmatpush.msra.mxu0 0.0
    %295 = vmatpush.msra.mxu0 0.0
    %296 = vmatpush.msra.mxu0 0.0
    %297 = vmatpush.msra.mxu0 0.0
    %298 = vmatpush.msra.mxu0 0.0
    %299 = vmatpush.msra.mxu0 0.0
    %300 = vmatpush.msra.mxu0 0.0
    %301 = vmatpush.msra.mxu0 0.0
    %302 = vmatpush.msra.mxu0 0.0
    %303 = vmatpush.msra.mxu0 0.0
    %304 = vmatpush.msra.mxu0 0.0
    %305 = vmatpush.msra.mxu0 0.0
    %306 = vmatpush.msra.mxu0 0.0
    %307 = vmatpush.msra.mxu0 %v288
    %308 = vmatmul.f32.gmra.mxu0 %v290
    %v309 = vpop.f32.mrf.mxu0
    %v310 = vadd.f32 0.0, %v309
    %311 = vdwg.mxu0
    %v313 = vsel %vm154, %v288, 0
    %315 = vmatpush.msra.mxu0 0.0
    %316 = vmatpush.msra.mxu0 0.0
    %317 = vmatpush.msra.mxu0 0.0
    %318 = vmatpush.msra.mxu0 0.0
    %319 = vmatpush.msra.mxu0 0.0
    %320 = vmatpush.msra.mxu0 0.0
    %321 = vmatpush.msra.mxu0 0.0
    %322 = vmatpush.msra.mxu0 0.0
    %323 = vmatpush.msra.mxu0 0.0
    %324 = vmatpush.msra.mxu0 0.0
    %325 = vmatpush.msra.mxu0 0.0
    %326 = vmatpush.msra.mxu0 0.0
    %327 = vmatpush.msra.mxu0 0.0
    %328 = vmatpush.msra.mxu0 0.0
    %329 = vmatpush.msra.mxu0 0.0
    %330 = vmatpush.msra.mxu0 %v262
    %331 = vmatmul.f32.gmra.mxu0 %v313
    %v332 = vpop.f32.mrf.mxu0
    %v333 = vadd.f32 0.0, %v332
    %334 = vdwg.mxu0
    %v336 = vsel %vm154, %v333, 0
    %338 = vmatpush.msra.mxu0 0.0
    %339 = vmatpush.msra.mxu0 0.0
    %340 = vmatpush.msra.mxu0 0.0
    %341 = vmatpush.msra.mxu0 0.0
    %342 = vmatpush.msra.mxu0 0.0
    %343 = vmatpush.msra.mxu0 0.0
    %344 = vmatpush.msra.mxu0 0.0
    %345 = vmatpush.msra.mxu0 0.0
    %346 = vmatpush.msra.mxu0 0.0
    %347 = vmatpush.msra.mxu0 0.0
    %348 = vmatpush.msra.mxu0 0.0
    %349 = vmatpush.msra.mxu0 0.0
    %350 = vmatpush.msra.mxu0 0.0
    %351 = vmatpush.msra.mxu0 0.0
    %352 = vmatpush.msra.mxu0 0.0
    %353 = vmatpush.msra.mxu0 %v310
    %354 = vmatmul.f32.gmra.mxu0 %v336
    %v355 = vpop.f32.mrf.mxu0
    %v356 = vadd.f32 0.0, %v355
    %357 = vdwg.mxu0
    %v358 = vsub.f32 %v38, %v356
    %v359 = vmul.f32 %v358, 0.5
    %v361 = vsel %vm154, %v310, 0
    %363 = vmatpush.msra.mxu0 0.0
    %364 = vmatpush.msra.mxu0 0.0
    %365 = vmatpush.msra.mxu0 0.0
    %366 = vmatpush.msra.mxu0 0.0
    %367 = vmatpush.msra.mxu0 0.0
    %368 = vmatpush.msra.mxu0 0.0
    %369 = vmatpush.msra.mxu0 0.0
    %370 = vmatpush.msra.mxu0 0.0
    %371 = vmatpush.msra.mxu0 0.0
    %372 = vmatpush.msra.mxu0 0.0
    %373 = vmatpush.msra.mxu0 0.0
    %374 = vmatpush.msra.mxu0 0.0
    %375 = vmatpush.msra.mxu0 0.0
    %376 = vmatpush.msra.mxu0 0.0
    %377 = vmatpush.msra.mxu0 0.0
    %378 = vmatpush.msra.mxu0 %v359
    %379 = vmatmul.f32.gmra.mxu0 %v361
    %v380 = vpop.f32.mrf.mxu0
    %v381 = vadd.f32 0.0, %v380
    %382 = vdwg.mxu0
    %v384 = vsel %vm154, %v359, 0
    %386 = vmatpush.msra.mxu0 0.0
    %387 = vmatpush.msra.mxu0 0.0
    %388 = vmatpush.msra.mxu0 0.0
    %389 = vmatpush.msra.mxu0 0.0
    %390 = vmatpush.msra.mxu0 0.0
    %391 = vmatpush.msra.mxu0 0.0
    %392 = vmatpush.msra.mxu0 0.0
    %393 = vmatpush.msra.mxu0 0.0
    %394 = vmatpush.msra.mxu0 0.0
    %395 = vmatpush.msra.mxu0 0.0
    %396 = vmatpush.msra.mxu0 0.0
    %397 = vmatpush.msra.mxu0 0.0
    %398 = vmatpush.msra.mxu0 0.0
    %399 = vmatpush.msra.mxu0 0.0
    %400 = vmatpush.msra.mxu0 0.0
    %401 = vmatpush.msra.mxu0 %v333
    %402 = vmatmul.f32.gmra.mxu0 %v384
    %v403 = vpop.f32.mrf.mxu0
    %v404 = vadd.f32 0.0, %v403
    %405 = vdwg.mxu0
    %v407 = vsel %vm154, %v404, 0
    %409 = vmatpush.msra.mxu0 0.0
    %410 = vmatpush.msra.mxu0 0.0
    %411 = vmatpush.msra.mxu0 0.0
    %412 = vmatpush.msra.mxu0 0.0
    %413 = vmatpush.msra.mxu0 0.0
    %414 = vmatpush.msra.mxu0 0.0
    %415 = vmatpush.msra.mxu0 0.0
    %416 = vmatpush.msra.mxu0 0.0
    %417 = vmatpush.msra.mxu0 0.0
    %418 = vmatpush.msra.mxu0 0.0
    %419 = vmatpush.msra.mxu0 0.0
    %420 = vmatpush.msra.mxu0 0.0
    %421 = vmatpush.msra.mxu0 0.0
    %422 = vmatpush.msra.mxu0 0.0
    %423 = vmatpush.msra.mxu0 0.0
    %424 = vmatpush.msra.mxu0 %v381
    %425 = vmatmul.f32.gmra.mxu0 %v407
    %v426 = vpop.f32.mrf.mxu0
    %v427 = vadd.f32 0.0, %v426
    %428 = vdwg.mxu0
    %v429 = vsub.f32 %v38, %v427
    %v430 = vmul.f32 %v429, 0.5
    %v432 = vsel %vm154, %v381, 0
    %434 = vmatpush.msra.mxu0 0.0
    %435 = vmatpush.msra.mxu0 0.0
    %436 = vmatpush.msra.mxu0 0.0
    %437 = vmatpush.msra.mxu0 0.0
    %438 = vmatpush.msra.mxu0 0.0
    %439 = vmatpush.msra.mxu0 0.0
    %440 = vmatpush.msra.mxu0 0.0
    %441 = vmatpush.msra.mxu0 0.0
    %442 = vmatpush.msra.mxu0 0.0
    %443 = vmatpush.msra.mxu0 0.0
    %444 = vmatpush.msra.mxu0 0.0
    %445 = vmatpush.msra.mxu0 0.0
    %446 = vmatpush.msra.mxu0 0.0
    %447 = vmatpush.msra.mxu0 0.0
    %448 = vmatpush.msra.mxu0 0.0
    %449 = vmatpush.msra.mxu0 %v430
    %450 = vmatmul.f32.gmra.mxu0 %v432
    %v451 = vpop.f32.mrf.mxu0
    %v452 = vadd.f32 0.0, %v451
    %453 = vdwg.mxu0
    %v455 = vsel %vm154, %v430, 0
    %457 = vmatpush.msra.mxu0 0.0
    %458 = vmatpush.msra.mxu0 0.0
    %459 = vmatpush.msra.mxu0 0.0
    %460 = vmatpush.msra.mxu0 0.0
    %461 = vmatpush.msra.mxu0 0.0
    %462 = vmatpush.msra.mxu0 0.0
    %463 = vmatpush.msra.mxu0 0.0
    %464 = vmatpush.msra.mxu0 0.0
    %465 = vmatpush.msra.mxu0 0.0
    %466 = vmatpush.msra.mxu0 0.0
    %467 = vmatpush.msra.mxu0 0.0
    %468 = vmatpush.msra.mxu0 0.0
    %469 = vmatpush.msra.mxu0 0.0
    %470 = vmatpush.msra.mxu0 0.0
    %471 = vmatpush.msra.mxu0 0.0
    %472 = vmatpush.msra.mxu0 %v404
    %473 = vmatmul.f32.gmra.mxu0 %v455
    %v474 = vpop.f32.mrf.mxu0
    %v475 = vadd.f32 0.0, %v474
    %476 = vdwg.mxu0
    %v478 = vsel %vm154, %v475, 0
    %480 = vmatpush.msra.mxu0 0.0
    %481 = vmatpush.msra.mxu0 0.0
    %482 = vmatpush.msra.mxu0 0.0
    %483 = vmatpush.msra.mxu0 0.0
    %484 = vmatpush.msra.mxu0 0.0
    %485 = vmatpush.msra.mxu0 0.0
    %486 = vmatpush.msra.mxu0 0.0
    %487 = vmatpush.msra.mxu0 0.0
    %488 = vmatpush.msra.mxu0 0.0
    %489 = vmatpush.msra.mxu0 0.0
    %490 = vmatpush.msra.mxu0 0.0
    %491 = vmatpush.msra.mxu0 0.0
    %492 = vmatpush.msra.mxu0 0.0
    %493 = vmatpush.msra.mxu0 0.0
    %494 = vmatpush.msra.mxu0 0.0
    %495 = vmatpush.msra.mxu0 %v452
    %496 = vmatmul.f32.gmra.mxu0 %v478
    %v497 = vpop.f32.mrf.mxu0
    %v498 = vadd.f32 0.0, %v497
    %499 = vdwg.mxu0
    %v500 = vsub.f32 %v38, %v498
    %v501 = vmul.f32 %v500, 0.5
    %v503 = vsel %vm154, %v452, 0
    %505 = vmatpush.msra.mxu0 0.0
    %506 = vmatpush.msra.mxu0 0.0
    %507 = vmatpush.msra.mxu0 0.0
    %508 = vmatpush.msra.mxu0 0.0
    %509 = vmatpush.msra.mxu0 0.0
    %510 = vmatpush.msra.mxu0 0.0
    %511 = vmatpush.msra.mxu0 0.0
    %512 = vmatpush.msra.mxu0 0.0
    %513 = vmatpush.msra.mxu0 0.0
    %514 = vmatpush.msra.mxu0 0.0
    %515 = vmatpush.msra.mxu0 0.0
    %516 = vmatpush.msra.mxu0 0.0
    %517 = vmatpush.msra.mxu0 0.0
    %518 = vmatpush.msra.mxu0 0.0
    %519 = vmatpush.msra.mxu0 0.0
    %520 = vmatpush.msra.mxu0 %v501
    %521 = vmatmul.f32.gmra.mxu0 %v503
    %v522 = vpop.f32.mrf.mxu0
    %v523 = vadd.f32 0.0, %v522
    %524 = vdwg.mxu0
    %v526 = vsel %vm154, %v501, 0
    %528 = vmatpush.msra.mxu0 0.0
    %529 = vmatpush.msra.mxu0 0.0
    %530 = vmatpush.msra.mxu0 0.0
    %531 = vmatpush.msra.mxu0 0.0
    %532 = vmatpush.msra.mxu0 0.0
    %533 = vmatpush.msra.mxu0 0.0
    %534 = vmatpush.msra.mxu0 0.0
    %535 = vmatpush.msra.mxu0 0.0
    %536 = vmatpush.msra.mxu0 0.0
    %537 = vmatpush.msra.mxu0 0.0
    %538 = vmatpush.msra.mxu0 0.0
    %539 = vmatpush.msra.mxu0 0.0
    %540 = vmatpush.msra.mxu0 0.0
    %541 = vmatpush.msra.mxu0 0.0
    %542 = vmatpush.msra.mxu0 0.0
    %543 = vmatpush.msra.mxu0 %v475
    %544 = vmatmul.f32.gmra.mxu0 %v526
    %v545 = vpop.f32.mrf.mxu0
    %v546 = vadd.f32 0.0, %v545
    %547 = vdwg.mxu0
    %v549 = vsel %vm154, %v546, 0
    %551 = vmatpush.msra.mxu0 0.0
    %552 = vmatpush.msra.mxu0 0.0
    %553 = vmatpush.msra.mxu0 0.0
    %554 = vmatpush.msra.mxu0 0.0
    %555 = vmatpush.msra.mxu0 0.0
    %556 = vmatpush.msra.mxu0 0.0
    %557 = vmatpush.msra.mxu0 0.0
    %558 = vmatpush.msra.mxu0 0.0
    %559 = vmatpush.msra.mxu0 0.0
    %560 = vmatpush.msra.mxu0 0.0
    %561 = vmatpush.msra.mxu0 0.0
    %562 = vmatpush.msra.mxu0 0.0
    %563 = vmatpush.msra.mxu0 0.0
    %564 = vmatpush.msra.mxu0 0.0
    %565 = vmatpush.msra.mxu0 0.0
    %566 = vmatpush.msra.mxu0 %v523
    %567 = vmatmul.f32.gmra.mxu0 %v549
    %v568 = vpop.f32.mrf.mxu0
    %v569 = vadd.f32 0.0, %v568
    %570 = vdwg.mxu0
    %v571 = vsub.f32 %v38, %v569
    %v572 = vmul.f32 %v571, 0.5
    %v574 = vsel %vm154, %v523, 0
    %576 = vmatpush.msra.mxu0 0.0
    %577 = vmatpush.msra.mxu0 0.0
    %578 = vmatpush.msra.mxu0 0.0
    %579 = vmatpush.msra.mxu0 0.0
    %580 = vmatpush.msra.mxu0 0.0
    %581 = vmatpush.msra.mxu0 0.0
    %582 = vmatpush.msra.mxu0 0.0
    %583 = vmatpush.msra.mxu0 0.0
    %584 = vmatpush.msra.mxu0 0.0
    %585 = vmatpush.msra.mxu0 0.0
    %586 = vmatpush.msra.mxu0 0.0
    %587 = vmatpush.msra.mxu0 0.0
    %588 = vmatpush.msra.mxu0 0.0
    %589 = vmatpush.msra.mxu0 0.0
    %590 = vmatpush.msra.mxu0 0.0
    %591 = vmatpush.msra.mxu0 %v572
    %592 = vmatmul.f32.gmra.mxu0 %v574
    %v593 = vpop.f32.mrf.mxu0
    %v594 = vadd.f32 0.0, %v593
    %595 = vdwg.mxu0
    %v597 = vsel %vm154, %v572, 0
    %599 = vmatpush.msra.mxu0 0.0
    %600 = vmatpush.msra.mxu0 0.0
    %601 = vmatpush.msra.mxu0 0.0
    %602 = vmatpush.msra.mxu0 0.0
    %603 = vmatpush.msra.mxu0 0.0
    %604 = vmatpush.msra.mxu0 0.0
    %605 = vmatpush.msra.mxu0 0.0
    %606 = vmatpush.msra.mxu0 0.0
    %607 = vmatpush.msra.mxu0 0.0
    %608 = vmatpush.msra.mxu0 0.0
    %609 = vmatpush.msra.mxu0 0.0
    %610 = vmatpush.msra.mxu0 0.0
    %611 = vmatpush.msra.mxu0 0.0
    %612 = vmatpush.msra.mxu0 0.0
    %613 = vmatpush.msra.mxu0 0.0
    %614 = vmatpush.msra.mxu0 %v546
    %615 = vmatmul.f32.gmra.mxu0 %v597
    %v616 = vpop.f32.mrf.mxu0
    %v617 = vadd.f32 0.0, %v616
    %618 = vdwg.mxu0
    %v620 = vsel %vm154, %v617, 0
    %622 = vmatpush.msra.mxu0 0.0
    %623 = vmatpush.msra.mxu0 0.0
    %624 = vmatpush.msra.mxu0 0.0
    %625 = vmatpush.msra.mxu0 0.0
    %626 = vmatpush.msra.mxu0 0.0
    %627 = vmatpush.msra.mxu0 0.0
    %628 = vmatpush.msra.mxu0 0.0
    %629 = vmatpush.msra.mxu0 0.0
    %630 = vmatpush.msra.mxu0 0.0
    %631 = vmatpush.msra.mxu0 0.0
    %632 = vmatpush.msra.mxu0 0.0
    %633 = vmatpush.msra.mxu0 0.0
    %634 = vmatpush.msra.mxu0 0.0
    %635 = vmatpush.msra.mxu0 0.0
    %636 = vmatpush.msra.mxu0 0.0
    %637 = vmatpush.msra.mxu0 %v594
    %638 = vmatmul.f32.gmra.mxu0 %v620
    %v639 = vpop.f32.mrf.mxu0
    %v640 = vadd.f32 0.0, %v639
    %641 = vdwg.mxu0
    %v642 = vsub.f32 %v38, %v640
    %v643 = vmul.f32 %v642, 0.5
    %v645 = vsel %vm154, %v594, 0
    %647 = vmatpush.msra.mxu0 0.0
    %648 = vmatpush.msra.mxu0 0.0
    %649 = vmatpush.msra.mxu0 0.0
    %650 = vmatpush.msra.mxu0 0.0
    %651 = vmatpush.msra.mxu0 0.0
    %652 = vmatpush.msra.mxu0 0.0
    %653 = vmatpush.msra.mxu0 0.0
    %654 = vmatpush.msra.mxu0 0.0
    %655 = vmatpush.msra.mxu0 0.0
    %656 = vmatpush.msra.mxu0 0.0
    %657 = vmatpush.msra.mxu0 0.0
    %658 = vmatpush.msra.mxu0 0.0
    %659 = vmatpush.msra.mxu0 0.0
    %660 = vmatpush.msra.mxu0 0.0
    %661 = vmatpush.msra.mxu0 0.0
    %662 = vmatpush.msra.mxu0 %v643
    %663 = vmatmul.f32.gmra.mxu0 %v645
    %v664 = vpop.f32.mrf.mxu0
    %v665 = vadd.f32 0.0, %v664
    %666 = vdwg.mxu0
    %v668 = vsel %vm154, %v643, 0
    %670 = vmatpush.msra.mxu0 0.0
    %671 = vmatpush.msra.mxu0 0.0
    %672 = vmatpush.msra.mxu0 0.0
    %673 = vmatpush.msra.mxu0 0.0
    %674 = vmatpush.msra.mxu0 0.0
    %675 = vmatpush.msra.mxu0 0.0
    %676 = vmatpush.msra.mxu0 0.0
    %677 = vmatpush.msra.mxu0 0.0
    %678 = vmatpush.msra.mxu0 0.0
    %679 = vmatpush.msra.mxu0 0.0
    %680 = vmatpush.msra.mxu0 0.0
    %681 = vmatpush.msra.mxu0 0.0
    %682 = vmatpush.msra.mxu0 0.0
    %683 = vmatpush.msra.mxu0 0.0
    %684 = vmatpush.msra.mxu0 0.0
    %685 = vmatpush.msra.mxu0 %v617
    %686 = vmatmul.f32.gmra.mxu0 %v668
    %v687 = vpop.f32.mrf.mxu0
    %v688 = vadd.f32 0.0, %v687
    %689 = vdwg.mxu0
    %v691 = vsel %vm154, %v688, 0
    %693 = vmatpush.msra.mxu0 0.0
    %694 = vmatpush.msra.mxu0 0.0
    %695 = vmatpush.msra.mxu0 0.0
    %696 = vmatpush.msra.mxu0 0.0
    %697 = vmatpush.msra.mxu0 0.0
    %698 = vmatpush.msra.mxu0 0.0
    %699 = vmatpush.msra.mxu0 0.0
    %700 = vmatpush.msra.mxu0 0.0
    %701 = vmatpush.msra.mxu0 0.0
    %702 = vmatpush.msra.mxu0 0.0
    %703 = vmatpush.msra.mxu0 0.0
    %704 = vmatpush.msra.mxu0 0.0
    %705 = vmatpush.msra.mxu0 0.0
    %706 = vmatpush.msra.mxu0 0.0
    %707 = vmatpush.msra.mxu0 0.0
    %708 = vmatpush.msra.mxu0 %v665
    %709 = vmatmul.f32.gmra.mxu0 %v691
    %v710 = vpop.f32.mrf.mxu0
    %v711 = vadd.f32 0.0, %v710
    %712 = vdwg.mxu0
    %v713 = vsub.f32 %v38, %v711
    %v714 = vmul.f32 %v713, 0.5
    %v716 = vsel %vm154, %v665, 0
    %718 = vmatpush.msra.mxu0 0.0
    %719 = vmatpush.msra.mxu0 0.0
    %720 = vmatpush.msra.mxu0 0.0
    %721 = vmatpush.msra.mxu0 0.0
    %722 = vmatpush.msra.mxu0 0.0
    %723 = vmatpush.msra.mxu0 0.0
    %724 = vmatpush.msra.mxu0 0.0
    %725 = vmatpush.msra.mxu0 0.0
    %726 = vmatpush.msra.mxu0 0.0
    %727 = vmatpush.msra.mxu0 0.0
    %728 = vmatpush.msra.mxu0 0.0
    %729 = vmatpush.msra.mxu0 0.0
    %730 = vmatpush.msra.mxu0 0.0
    %731 = vmatpush.msra.mxu0 0.0
    %732 = vmatpush.msra.mxu0 0.0
    %733 = vmatpush.msra.mxu0 %v714
    %734 = vmatmul.f32.gmra.mxu0 %v716
    %v735 = vpop.f32.mrf.mxu0
    %v736 = vadd.f32 0.0, %v735
    %737 = vdwg.mxu0
    %v739 = vsel %vm154, %v714, 0
    %741 = vmatpush.msra.mxu0 0.0
    %742 = vmatpush.msra.mxu0 0.0
    %743 = vmatpush.msra.mxu0 0.0
    %744 = vmatpush.msra.mxu0 0.0
    %745 = vmatpush.msra.mxu0 0.0
    %746 = vmatpush.msra.mxu0 0.0
    %747 = vmatpush.msra.mxu0 0.0
    %748 = vmatpush.msra.mxu0 0.0
    %749 = vmatpush.msra.mxu0 0.0
    %750 = vmatpush.msra.mxu0 0.0
    %751 = vmatpush.msra.mxu0 0.0
    %752 = vmatpush.msra.mxu0 0.0
    %753 = vmatpush.msra.mxu0 0.0
    %754 = vmatpush.msra.mxu0 0.0
    %755 = vmatpush.msra.mxu0 0.0
    %756 = vmatpush.msra.mxu0 %v688
    %757 = vmatmul.f32.gmra.mxu0 %v739
    %v758 = vpop.f32.mrf.mxu0
    %v759 = vadd.f32 0.0, %v758
    %760 = vdwg.mxu0
    %v762 = vsel %vm154, %v759, 0
    %764 = vmatpush.msra.mxu0 0.0
    %765 = vmatpush.msra.mxu0 0.0
    %766 = vmatpush.msra.mxu0 0.0
    %767 = vmatpush.msra.mxu0 0.0
    %768 = vmatpush.msra.mxu0 0.0
    %769 = vmatpush.msra.mxu0 0.0
    %770 = vmatpush.msra.mxu0 0.0
    %771 = vmatpush.msra.mxu0 0.0
    %772 = vmatpush.msra.mxu0 0.0
    %773 = vmatpush.msra.mxu0 0.0
    %774 = vmatpush.msra.mxu0 0.0
    %775 = vmatpush.msra.mxu0 0.0
    %776 = vmatpush.msra.mxu0 0.0
    %777 = vmatpush.msra.mxu0 0.0
    %778 = vmatpush.msra.mxu0 0.0
    %779 = vmatpush.msra.mxu0 %v736
    %780 = vmatmul.f32.gmra.mxu0 %v762
    %v781 = vpop.f32.mrf.mxu0
    %v782 = vadd.f32 0.0, %v781
    %783 = vdwg.mxu0
    %v784 = vsub.f32 %v38, %v782
    %v785 = vmul.f32 %v784, 0.5
    %v787 = vsel %vm154, %v736, 0
    %789 = vmatpush.msra.mxu0 0.0
    %790 = vmatpush.msra.mxu0 0.0
    %791 = vmatpush.msra.mxu0 0.0
    %792 = vmatpush.msra.mxu0 0.0
    %793 = vmatpush.msra.mxu0 0.0
    %794 = vmatpush.msra.mxu0 0.0
    %795 = vmatpush.msra.mxu0 0.0
    %796 = vmatpush.msra.mxu0 0.0
    %797 = vmatpush.msra.mxu0 0.0
    %798 = vmatpush.msra.mxu0 0.0
    %799 = vmatpush.msra.mxu0 0.0
    %800 = vmatpush.msra.mxu0 0.0
    %801 = vmatpush.msra.mxu0 0.0
    %802 = vmatpush.msra.mxu0 0.0
    %803 = vmatpush.msra.mxu0 0.0
    %804 = vmatpush.msra.mxu0 %v785
    %805 = vmatmul.f32.gmra.mxu0 %v787
    %v806 = vpop.f32.mrf.mxu0
    %v807 = vadd.f32 0.0, %v806
    %808 = vdwg.mxu0
    %v810 = vsel %vm154, %v785, 0
    %812 = vmatpush.msra.mxu0 0.0
    %813 = vmatpush.msra.mxu0 0.0
    %814 = vmatpush.msra.mxu0 0.0
    %815 = vmatpush.msra.mxu0 0.0
    %816 = vmatpush.msra.mxu0 0.0
    %817 = vmatpush.msra.mxu0 0.0
    %818 = vmatpush.msra.mxu0 0.0
    %819 = vmatpush.msra.mxu0 0.0
    %820 = vmatpush.msra.mxu0 0.0
    %821 = vmatpush.msra.mxu0 0.0
    %822 = vmatpush.msra.mxu0 0.0
    %823 = vmatpush.msra.mxu0 0.0
    %824 = vmatpush.msra.mxu0 0.0
    %825 = vmatpush.msra.mxu0 0.0
    %826 = vmatpush.msra.mxu0 0.0
    %827 = vmatpush.msra.mxu0 %v759
    %828 = vmatmul.f32.gmra.mxu0 %v810
    %v829 = vpop.f32.mrf.mxu0
    %v830 = vadd.f32 0.0, %v829
    %831 = vdwg.mxu0
    %v833 = vsel %vm154, %v830, 0
    %835 = vmatpush.msra.mxu0 0.0
    %836 = vmatpush.msra.mxu0 0.0
    %837 = vmatpush.msra.mxu0 0.0
    %838 = vmatpush.msra.mxu0 0.0
    %839 = vmatpush.msra.mxu0 0.0
    %840 = vmatpush.msra.mxu0 0.0
    %841 = vmatpush.msra.mxu0 0.0
    %842 = vmatpush.msra.mxu0 0.0
    %843 = vmatpush.msra.mxu0 0.0
    %844 = vmatpush.msra.mxu0 0.0
    %845 = vmatpush.msra.mxu0 0.0
    %846 = vmatpush.msra.mxu0 0.0
    %847 = vmatpush.msra.mxu0 0.0
    %848 = vmatpush.msra.mxu0 0.0
    %849 = vmatpush.msra.mxu0 0.0
    %850 = vmatpush.msra.mxu0 %v807
    %851 = vmatmul.f32.gmra.mxu0 %v833
    %v852 = vpop.f32.mrf.mxu0
    %v853 = vadd.f32 0.0, %v852
    %854 = vdwg.mxu0
    %v855 = vsub.f32 %v38, %v853
    %v856 = vmul.f32 %v855, 0.5
    %v858 = vsel %vm154, %v856, 0
    %860 = vmatpush.msra.mxu0 0.0
    %861 = vmatpush.msra.mxu0 0.0
    %862 = vmatpush.msra.mxu0 0.0
    %863 = vmatpush.msra.mxu0 0.0
    %864 = vmatpush.msra.mxu0 0.0
    %865 = vmatpush.msra.mxu0 0.0
    %866 = vmatpush.msra.mxu0 0.0
    %867 = vmatpush.msra.mxu0 0.0
    %868 = vmatpush.msra.mxu0 0.0
    %869 = vmatpush.msra.mxu0 0.0
    %870 = vmatpush.msra.mxu0 0.0
    %871 = vmatpush.msra.mxu0 0.0
    %872 = vmatpush.msra.mxu0 0.0
    %873 = vmatpush.msra.mxu0 0.0
    %874 = vmatpush.msra.mxu0 0.0
    %875 = vmatpush.msra.mxu0 %v830
    %876 = vmatmul.f32.gmra.mxu0 %v858
    %v877 = vpop.f32.mrf.mxu0
    %v878 = vadd.f32 0.0, %v877
    %879 = vdwg.mxu0
    %v880 = vrsqrt.pop %v177
    %v881 = vmul.f32 %v880, %v177
    %v882 = vmul.f32 %v881, %v880
    %v883 = vmul.f32 0.5, %v882
    %v884 = vsub.f32 1.5, %v883
    %v885 = vmul.f32 %v880, %v884
    %vm886 = vweird.f32 %v177
    %vm887 = vweird.f32 %v880
    %vm888 = vmor %vm886, %vm887
    %v889 = vsel %vm888, %v880, %v885
    %v890 = vmul.f32 %v878, %v889
    %v892 = vsel %vm154, %v40, 0
    %894 = vmatpush.msra.mxu0 0.0
    %895 = vmatpush.msra.mxu0 0.0
    %896 = vmatpush.msra.mxu0 0.0
    %897 = vmatpush.msra.mxu0 0.0
    %898 = vmatpush.msra.mxu0 0.0
    %899 = vmatpush.msra.mxu0 0.0
    %900 = vmatpush.msra.mxu0 0.0
    %901 = vmatpush.msra.mxu0 0.0
    %902 = vmatpush.msra.mxu0 0.0
    %903 = vmatpush.msra.mxu0 0.0
    %904 = vmatpush.msra.mxu0 0.0
    %905 = vmatpush.msra.mxu0 0.0
    %906 = vmatpush.msra.mxu0 0.0
    %907 = vmatpush.msra.mxu0 0.0
    %908 = vmatpush.msra.mxu0 0.0
    %909 = vmatpush.msra.mxu0 %v890
    %910 = vmatmul.f32.gmra.mxu0 %v892
    %v911 = vpop.f32.mrf.mxu0
    %v912 = vadd.f32 0.0, %v911
    %913 = vdwg.mxu0
    %v915 = vsel %vm154, %v912, 0
    %917 = vmatpush.msra.mxu0 0.0
    %918 = vmatpush.msra.mxu0 0.0
    %919 = vmatpush.msra.mxu0 0.0
    %920 = vmatpush.msra.mxu0 0.0
    %921 = vmatpush.msra.mxu0 0.0
    %922 = vmatpush.msra.mxu0 0.0
    %923 = vmatpush.msra.mxu0 0.0
    %924 = vmatpush.msra.mxu0 0.0
    %925 = vmatpush.msra.mxu0 0.0
    %926 = vmatpush.msra.mxu0 0.0
    %927 = vmatpush.msra.mxu0 0.0
    %928 = vmatpush.msra.mxu0 0.0
    %929 = vmatpush.msra.mxu0 0.0
    %930 = vmatpush.msra.mxu0 0.0
    %931 = vmatpush.msra.mxu0 0.0
    %932 = vmatpush.msra.mxu0 %v125
    %933 = vmatmul.f32.gmra.mxu0 %v915
    %v934 = vpop.f32.mrf.mxu0
    %v935 = vadd.f32 0.0, %v934
    %936 = vdwg.mxu0
    %v937 = vsub.f32 %v41, %v935
    %939 = vset.pattern.permute.xlu0 0
    %940 = vperm.xlu0 %939, %v937
    %v941 = vpop.permute.xlu0 %940
    %943 = vmatpush.msra.mxu0 0.0
    %944 = vmatpush.msra.mxu0 0.0
    %945 = vmatpush.msra.mxu0 0.0
    %946 = vmatpush.msra.mxu0 0.0
    %947 = vmatpush.msra.mxu0 0.0
    %948 = vmatpush.msra.mxu0 0.0
    %949 = vmatpush.msra.mxu0 0.0
    %950 = vmatpush.msra.mxu0 0.0
    %951 = vmatpush.msra.mxu0 0.0
    %952 = vmatpush.msra.mxu0 0.0
    %953 = vmatpush.msra.mxu0 0.0
    %954 = vmatpush.msra.mxu0 0.0
    %955 = vmatpush.msra.mxu0 0.0
    %956 = vmatpush.msra.mxu0 0.0
    %957 = vmatpush.msra.mxu0 0.0
    %958 = vmatpush.msra.mxu0 %v42
    %959 = vmatmul.f32.gmra.mxu0 %v915
    %v960 = vpop.f32.mrf.mxu0
    %v961 = vadd.f32 %v941, %v960
    %962 = vdwg.mxu0
    %963 = vmatpush.msra.mxu0 0.0
    %964 = vmatpush.msra.mxu0 0.0
    %965 = vmatpush.msra.mxu0 0.0
    %966 = vmatpush.msra.mxu0 0.0
    %967 = vmatpush.msra.mxu0 0.0
    %968 = vmatpush.msra.mxu0 0.0
    %969 = vmatpush.msra.mxu0 0.0
    %970 = vmatpush.msra.mxu0 0.0
    %971 = vmatpush.msra.mxu0 0.0
    %972 = vmatpush.msra.mxu0 0.0
    %973 = vmatpush.msra.mxu0 0.0
    %974 = vmatpush.msra.mxu0 0.0
    %975 = vmatpush.msra.mxu0 0.0
    %976 = vmatpush.msra.mxu0 0.0
    %977 = vmatpush.msra.mxu0 0.0
    %978 = vmatpush.msra.mxu0 %v44
    %979 = vmatmul.f32.gmra.mxu0 %v915
    %v980 = vpop.f32.mrf.mxu0
    %v981 = vadd.f32 %v941, %v980
    %982 = vdwg.mxu0
    %983 = vst [vmem:[#allocation5] sm:$0xff] %v961
    %s984 = scalar_lea.vmem [#allocation5], 8
    %985 = vst [vmem:[%s984] sm:$0xff] %v981
    %s986 = scalar_lea.vmem [#allocation2], 16
    %v987 = vld [vmem:[%s986] sm:$0xff]
    %s988 = scalar_lea.vmem [#allocation2], 24
    %v989 = vld [vmem:[%s988] sm:$0xff]
    %990 = vmatpush.xpose.msra.mxu0 0.0
    %991 = vmatpush.xpose.msra.mxu0 0.0
    %992 = vmatpush.xpose.msra.mxu0 0.0
    %993 = vmatpush.xpose.msra.mxu0 0.0
    %994 = vmatpush.xpose.msra.mxu0 0.0
    %995 = vmatpush.xpose.msra.mxu0 0.0
    %996 = vmatpush.xpose.msra.mxu0 0.0
    %997 = vmatpush.xpose.msra.mxu0 0.0
    %998 = vmatpush.xpose.msra.mxu0 0.0
    %999 = vmatpush.xpose.msra.mxu0 0.0
    %1000 = vmatpush.xpose.msra.mxu0 0.0
    %1001 = vmatpush.xpose.msra.mxu0 0.0
    %1002 = vmatpush.xpose.msra.mxu0 0.0
    %1003 = vmatpush.xpose.msra.mxu0 0.0
    %1004 = vmatpush.xpose.msra.mxu0 0.0
    %1005 = vmatpush.xpose.msra.mxu0 %v987
    %1006 = vmatmul.f32.gmra.mxu0 %v987
    %v1007 = vpop.f32.mrf.mxu0
    %v1008 = vadd.f32 0.0, %v1007
    %1009 = vdwg.mxu0
    %1010 = vmatpush.xpose.msra.mxu0 0.0
    %1011 = vmatpush.xpose.msra.mxu0 0.0
    %1012 = vmatpush.xpose.msra.mxu0 0.0
    %1013 = vmatpush.xpose.msra.mxu0 0.0
    %1014 = vmatpush.xpose.msra.mxu0 0.0
    %1015 = vmatpush.xpose.msra.mxu0 0.0
    %1016 = vmatpush.xpose.msra.mxu0 0.0
    %1017 = vmatpush.xpose.msra.mxu0 0.0
    %1018 = vmatpush.xpose.msra.mxu0 0.0
    %1019 = vmatpush.xpose.msra.mxu0 0.0
    %1020 = vmatpush.xpose.msra.mxu0 0.0
    %1021 = vmatpush.xpose.msra.mxu0 0.0
    %1022 = vmatpush.xpose.msra.mxu0 0.0
    %1023 = vmatpush.xpose.msra.mxu0 0.0
    %1024 = vmatpush.xpose.msra.mxu0 0.0
    %1025 = vmatpush.xpose.msra.mxu0 %v989
    %1026 = vmatmul.f32.gmra.mxu0 %v989
    %v1027 = vpop.f32.mrf.mxu0
    %v1028 = vadd.f32 %v1008, %v1027
    %1029 = vdwg.mxu0
    %1030 = vmatpush.msra.mxu0 1.0
    %1031 = vmatpush.msra.mxu0 1.0
    %1032 = vmatpush.msra.mxu0 1.0
    %1033 = vmatpush.msra.mxu0 1.0
    %1034 = vmatpush.msra.mxu0 1.0
    %1035 = vmatpush.msra.mxu0 1.0
    %1036 = vmatpush.msra.mxu0 1.0
    %1037 = vmatpush.msra.mxu0 1.0
    %1038 = vmatpush.msra.mxu0 1.0
    %1039 = vmatpush.msra.mxu0 1.0
    %1040 = vmatpush.msra.mxu0 1.0
    %1041 = vmatpush.msra.mxu0 1.0
    %1042 = vmatpush.msra.mxu0 1.0
    %1043 = vmatpush.msra.mxu0 1.0
    %1044 = vmatpush.msra.mxu0 1.0
    %1045 = vmatpush.msra.mxu0 1.0
    %1046 = vmatmul.f32.gmra.mxu0 %v987
    %v1047 = vpop.f32.mrf.mxu0
    %v1048 = vadd.f32 0.0, %v1047
    %1049 = vdwg.mxu0
    %1050 = vmatpush.msra.mxu0 1.0
    %1051 = vmatpush.msra.mxu0 1.0
    %1052 = vmatpush.msra.mxu0 1.0
    %1053 = vmatpush.msra.mxu0 1.0
    %1054 = vmatpush.msra.mxu0 1.0
    %1055 = vmatpush.msra.mxu0 1.0
    %1056 = vmatpush.msra.mxu0 1.0
    %1057 = vmatpush.msra.mxu0 1.0
    %1058 = vmatpush.msra.mxu0 1.0
    %1059 = vmatpush.msra.mxu0 1.0
    %1060 = vmatpush.msra.mxu0 1.0
    %1061 = vmatpush.msra.mxu0 1.0
    %1062 = vmatpush.msra.mxu0 1.0
    %1063 = vmatpush.msra.mxu0 1.0
    %1064 = vmatpush.msra.mxu0 1.0
    %1065 = vmatpush.msra.mxu0 1.0
    %1066 = vmatmul.f32.gmra.mxu0 %v989
    %v1067 = vpop.f32.mrf.mxu0
    %v1068 = vadd.f32 %v1048, %v1067
    %1069 = vdwg.mxu0
    %v1070 = vmul.f32 %v1068, 0.0078125
    %v1072 = vsel %vm126, %v1070, 0
    %1074 = vmatpush.xpose.msra.mxu0 0.0
    %1075 = vmatpush.xpose.msra.mxu0 0.0
    %1076 = vmatpush.xpose.msra.mxu0 0.0
    %1077 = vmatpush.xpose.msra.mxu0 0.0
    %1078 = vmatpush.xpose.msra.mxu0 0.0
    %1079 = vmatpush.xpose.msra.mxu0 0.0
    %1080 = vmatpush.xpose.msra.mxu0 0.0
    %1081 = vmatpush.xpose.msra.mxu0 0.0
    %1082 = vmatpush.xpose.msra.mxu0 0.0
    %1083 = vmatpush.xpose.msra.mxu0 0.0
    %1084 = vmatpush.xpose.msra.mxu0 0.0
    %1085 = vmatpush.xpose.msra.mxu0 0.0
    %1086 = vmatpush.xpose.msra.mxu0 0.0
    %1087 = vmatpush.xpose.msra.mxu0 0.0
    %1088 = vmatpush.xpose.msra.mxu0 0.0
    %1089 = vmatpush.xpose.msra.mxu0 %v1072
    %1090 = vmatmul.f32.gmra.mxu0 %v1072
    %v1091 = vpop.f32.mrf.mxu0
    %v1092 = vadd.f32 0.0, %v1091
    %1093 = vdwg.mxu0
    %v1094 = vmul.f32 %v1028, 0.0078125
    %v1095 = vsub.f32 %v1094, %v1092
    %v1096 = vadd.f32 %v1095, %v39
    %v1097 = vmul.f32 %v1096, %v1096
    %v1098 = vsel %vm154, %v1097, 0.0
    %1099 = vadd.xlane.f32.xlu0 %v1098
    %v1100 = vpop.xlane.xlu0 %1099
    %v1101 = vrot.slane %v1100, 4
    %v1102 = vadd.f32 %v1100, %v1101
    %v1103 = vrot.slane %v1102, 2
    %v1104 = vadd.f32 %v1102, %v1103
    %v1105 = vrot.slane %v1104, 1
    %v1106 = vadd.f32 %v1104, %v1105
    %s1107 = vtos %v1106
    %v1108 = vstv %s1107
    %v1109 = vrsqrt.pop %v1108
    %v1110 = vmul.f32 %v1109, %v1108
    %v1111 = vmul.f32 %v1110, %v1109
    %v1112 = vmul.f32 0.5, %v1111
    %v1113 = vsub.f32 1.5, %v1112
    %v1114 = vmul.f32 %v1109, %v1113
    %v1115 = vmul.f32 %v1108, %v1114
    %vm1116 = vcmp.eq.f32.partialorder %v1108, inf
    %v1117 = vsel %vm1116, %v1108, %v1115
    %vm1118 = vcmp.eq.f32.partialorder %v1108, 0.0
    %v1119 = vand.u32 %v1108, 2147483648
    %v1120 = vsel %vm1118, %v1119, %v1117
    %v1121 = vrcp.pop %v1120
    %v1122 = vmul.f32 %v1120, %v1121
    %v1123 = vsub.f32 1.0, %v1122
    %v1124 = vmul.f32 %v1121, %v1123
    %v1125 = vadd.f32 %v1121, %v1124
    %vm1126 = vweird.f32 %v1120
    %vm1127 = vweird.f32 %v1121
    %vm1128 = vmor %vm1126, %vm1127
    %v1129 = vsel %vm1128, %v1121, %v1125
    %v1130 = vand.u32 2147483647, %v1120
    %vm1131 = vcmp.eq.f32.partialorder %v1130, 8.507059e+37
    %v1132 = vand.u32 %v1120, 2147483648
    %v1133 = vor.u32 1.1754944e-38, %v1132
    %v1134 = vsel %vm1131, %v1133, %v1129
    %v1135 = vmul.f32 %v1096, %v1134
    %1136 = vmatpush.msra.mxu0 0.0
    %1137 = vmatpush.msra.mxu0 0.0
    %1138 = vmatpush.msra.mxu0 0.0
    %1139 = vmatpush.msra.mxu0 0.0
    %1140 = vmatpush.msra.mxu0 0.0
    %1141 = vmatpush.msra.mxu0 0.0
    %1142 = vmatpush.msra.mxu0 0.0
    %1143 = vmatpush.msra.mxu0 0.0
    %1144 = vmatpush.msra.mxu0 0.0
    %1145 = vmatpush.msra.mxu0 0.0
    %1146 = vmatpush.msra.mxu0 0.0
    %1147 = vmatpush.msra.mxu0 0.0
    %1148 = vmatpush.msra.mxu0 0.0
    %1149 = vmatpush.msra.mxu0 0.0
    %1150 = vmatpush.msra.mxu0 0.0
    %1151 = vmatpush.msra.mxu0 %v1135
    %1152 = vmatmul.f32.gmra.mxu0 %v194
    %v1153 = vpop.f32.mrf.mxu0
    %v1154 = vadd.f32 0.0, %v1153
    %1155 = vdwg.mxu0
    %v1156 = vsub.f32 %v38, %v1154
    %v1157 = vmul.f32 %v1156, 0.5
    %v1159 = vsel %vm154, %v1135, 0
    %1161 = vmatpush.msra.mxu0 0.0
    %1162 = vmatpush.msra.mxu0 0.0
    %1163 = vmatpush.msra.mxu0 0.0
    %1164 = vmatpush.msra.mxu0 0.0
    %1165 = vmatpush.msra.mxu0 0.0
    %1166 = vmatpush.msra.mxu0 0.0
    %1167 = vmatpush.msra.mxu0 0.0
    %1168 = vmatpush.msra.mxu0 0.0
    %1169 = vmatpush.msra.mxu0 0.0
    %1170 = vmatpush.msra.mxu0 0.0
    %1171 = vmatpush.msra.mxu0 0.0
    %1172 = vmatpush.msra.mxu0 0.0
    %1173 = vmatpush.msra.mxu0 0.0
    %1174 = vmatpush.msra.mxu0 0.0
    %1175 = vmatpush.msra.mxu0 0.0
    %1176 = vmatpush.msra.mxu0 %v1157
    %1177 = vmatmul.f32.gmra.mxu0 %v1159
    %v1178 = vpop.f32.mrf.mxu0
    %v1179 = vadd.f32 0.0, %v1178
    %1180 = vdwg.mxu0
    %v1182 = vsel %vm154, %v1157, 0
    %1184 = vmatpush.msra.mxu0 0.0
    %1185 = vmatpush.msra.mxu0 0.0
    %1186 = vmatpush.msra.mxu0 0.0
    %1187 = vmatpush.msra.mxu0 0.0
    %1188 = vmatpush.msra.mxu0 0.0
    %1189 = vmatpush.msra.mxu0 0.0
    %1190 = vmatpush.msra.mxu0 0.0
    %1191 = vmatpush.msra.mxu0 0.0
    %1192 = vmatpush.msra.mxu0 0.0
    %1193 = vmatpush.msra.mxu0 0.0
    %1194 = vmatpush.msra.mxu0 0.0
    %1195 = vmatpush.msra.mxu0 0.0
    %1196 = vmatpush.msra.mxu0 0.0
    %1197 = vmatpush.msra.mxu0 0.0
    %1198 = vmatpush.msra.mxu0 0.0
    %1199 = vmatpush.msra.mxu0 %v37
    %1200 = vmatmul.f32.gmra.mxu0 %v1182
    %v1201 = vpop.f32.mrf.mxu0
    %v1202 = vadd.f32 0.0, %v1201
    %1203 = vdwg.mxu0
    %v1205 = vsel %vm154, %v1202, 0
    %1207 = vmatpush.msra.mxu0 0.0
    %1208 = vmatpush.msra.mxu0 0.0
    %1209 = vmatpush.msra.mxu0 0.0
    %1210 = vmatpush.msra.mxu0 0.0
    %1211 = vmatpush.msra.mxu0 0.0
    %1212 = vmatpush.msra.mxu0 0.0
    %1213 = vmatpush.msra.mxu0 0.0
    %1214 = vmatpush.msra.mxu0 0.0
    %1215 = vmatpush.msra.mxu0 0.0
    %1216 = vmatpush.msra.mxu0 0.0
    %1217 = vmatpush.msra.mxu0 0.0
    %1218 = vmatpush.msra.mxu0 0.0
    %1219 = vmatpush.msra.mxu0 0.0
    %1220 = vmatpush.msra.mxu0 0.0
    %1221 = vmatpush.msra.mxu0 0.0
    %1222 = vmatpush.msra.mxu0 %v1179
    %1223 = vmatmul.f32.gmra.mxu0 %v1205
    %v1224 = vpop.f32.mrf.mxu0
    %v1225 = vadd.f32 0.0, %v1224
    %1226 = vdwg.mxu0
    %v1227 = vsub.f32 %v38, %v1225
    %v1228 = vmul.f32 %v1227, 0.5
    %v1230 = vsel %vm154, %v1179, 0
    %1232 = vmatpush.msra.mxu0 0.0
    %1233 = vmatpush.msra.mxu0 0.0
    %1234 = vmatpush.msra.mxu0 0.0
    %1235 = vmatpush.msra.mxu0 0.0
    %1236 = vmatpush.msra.mxu0 0.0
    %1237 = vmatpush.msra.mxu0 0.0
    %1238 = vmatpush.msra.mxu0 0.0
    %1239 = vmatpush.msra.mxu0 0.0
    %1240 = vmatpush.msra.mxu0 0.0
    %1241 = vmatpush.msra.mxu0 0.0
    %1242 = vmatpush.msra.mxu0 0.0
    %1243 = vmatpush.msra.mxu0 0.0
    %1244 = vmatpush.msra.mxu0 0.0
    %1245 = vmatpush.msra.mxu0 0.0
    %1246 = vmatpush.msra.mxu0 0.0
    %1247 = vmatpush.msra.mxu0 %v1228
    %1248 = vmatmul.f32.gmra.mxu0 %v1230
    %v1249 = vpop.f32.mrf.mxu0
    %v1250 = vadd.f32 0.0, %v1249
    %1251 = vdwg.mxu0
    %v1253 = vsel %vm154, %v1228, 0
    %1255 = vmatpush.msra.mxu0 0.0
    %1256 = vmatpush.msra.mxu0 0.0
    %1257 = vmatpush.msra.mxu0 0.0
    %1258 = vmatpush.msra.mxu0 0.0
    %1259 = vmatpush.msra.mxu0 0.0
    %1260 = vmatpush.msra.mxu0 0.0
    %1261 = vmatpush.msra.mxu0 0.0
    %1262 = vmatpush.msra.mxu0 0.0
    %1263 = vmatpush.msra.mxu0 0.0
    %1264 = vmatpush.msra.mxu0 0.0
    %1265 = vmatpush.msra.mxu0 0.0
    %1266 = vmatpush.msra.mxu0 0.0
    %1267 = vmatpush.msra.mxu0 0.0
    %1268 = vmatpush.msra.mxu0 0.0
    %1269 = vmatpush.msra.mxu0 0.0
    %1270 = vmatpush.msra.mxu0 %v1202
    %1271 = vmatmul.f32.gmra.mxu0 %v1253
    %v1272 = vpop.f32.mrf.mxu0
    %v1273 = vadd.f32 0.0, %v1272
    %1274 = vdwg.mxu0
    %v1276 = vsel %vm154, %v1273, 0
    %1278 = vmatpush.msra.mxu0 0.0
    %1279 = vmatpush.msra.mxu0 0.0
    %1280 = vmatpush.msra.mxu0 0.0
    %1281 = vmatpush.msra.mxu0 0.0
    %1282 = vmatpush.msra.mxu0 0.0
    %1283 = vmatpush.msra.mxu0 0.0
    %1284 = vmatpush.msra.mxu0 0.0
    %1285 = vmatpush.msra.mxu0 0.0
    %1286 = vmatpush.msra.mxu0 0.0
    %1287 = vmatpush.msra.mxu0 0.0
    %1288 = vmatpush.msra.mxu0 0.0
    %1289 = vmatpush.msra.mxu0 0.0
    %1290 = vmatpush.msra.mxu0 0.0
    %1291 = vmatpush.msra.mxu0 0.0
    %1292 = vmatpush.msra.mxu0 0.0
    %1293 = vmatpush.msra.mxu0 %v1250
    %1294 = vmatmul.f32.gmra.mxu0 %v1276
    %v1295 = vpop.f32.mrf.mxu0
    %v1296 = vadd.f32 0.0, %v1295
    %1297 = vdwg.mxu0
    %v1298 = vsub.f32 %v38, %v1296
    %v1299 = vmul.f32 %v1298, 0.5
    %v1301 = vsel %vm154, %v1250, 0
    %1303 = vmatpush.msra.mxu0 0.0
    %1304 = vmatpush.msra.mxu0 0.0
    %1305 = vmatpush.msra.mxu0 0.0
    %1306 = vmatpush.msra.mxu0 0.0
    %1307 = vmatpush.msra.mxu0 0.0
    %1308 = vmatpush.msra.mxu0 0.0
    %1309 = vmatpush.msra.mxu0 0.0
    %1310 = vmatpush.msra.mxu0 0.0
    %1311 = vmatpush.msra.mxu0 0.0
    %1312 = vmatpush.msra.mxu0 0.0
    %1313 = vmatpush.msra.mxu0 0.0
    %1314 = vmatpush.msra.mxu0 0.0
    %1315 = vmatpush.msra.mxu0 0.0
    %1316 = vmatpush.msra.mxu0 0.0
    %1317 = vmatpush.msra.mxu0 0.0
    %1318 = vmatpush.msra.mxu0 %v1299
    %1319 = vmatmul.f32.gmra.mxu0 %v1301
    %v1320 = vpop.f32.mrf.mxu0
    %v1321 = vadd.f32 0.0, %v1320
    %1322 = vdwg.mxu0
    %v1324 = vsel %vm154, %v1299, 0
    %1326 = vmatpush.msra.mxu0 0.0
    %1327 = vmatpush.msra.mxu0 0.0
    %1328 = vmatpush.msra.mxu0 0.0
    %1329 = vmatpush.msra.mxu0 0.0
    %1330 = vmatpush.msra.mxu0 0.0
    %1331 = vmatpush.msra.mxu0 0.0
    %1332 = vmatpush.msra.mxu0 0.0
    %1333 = vmatpush.msra.mxu0 0.0
    %1334 = vmatpush.msra.mxu0 0.0
    %1335 = vmatpush.msra.mxu0 0.0
    %1336 = vmatpush.msra.mxu0 0.0
    %1337 = vmatpush.msra.mxu0 0.0
    %1338 = vmatpush.msra.mxu0 0.0
    %1339 = vmatpush.msra.mxu0 0.0
    %1340 = vmatpush.msra.mxu0 0.0
    %1341 = vmatpush.msra.mxu0 %v1273
    %1342 = vmatmul.f32.gmra.mxu0 %v1324
    %v1343 = vpop.f32.mrf.mxu0
    %v1344 = vadd.f32 0.0, %v1343
    %1345 = vdwg.mxu0
    %v1347 = vsel %vm154, %v1344, 0
    %1349 = vmatpush.msra.mxu0 0.0
    %1350 = vmatpush.msra.mxu0 0.0
    %1351 = vmatpush.msra.mxu0 0.0
    %1352 = vmatpush.msra.mxu0 0.0
    %1353 = vmatpush.msra.mxu0 0.0
    %1354 = vmatpush.msra.mxu0 0.0
    %1355 = vmatpush.msra.mxu0 0.0
    %1356 = vmatpush.msra.mxu0 0.0
    %1357 = vmatpush.msra.mxu0 0.0
    %1358 = vmatpush.msra.mxu0 0.0
    %1359 = vmatpush.msra.mxu0 0.0
    %1360 = vmatpush.msra.mxu0 0.0
    %1361 = vmatpush.msra.mxu0 0.0
    %1362 = vmatpush.msra.mxu0 0.0
    %1363 = vmatpush.msra.mxu0 0.0
    %1364 = vmatpush.msra.mxu0 %v1321
    %1365 = vmatmul.f32.gmra.mxu0 %v1347
    %v1366 = vpop.f32.mrf.mxu0
    %v1367 = vadd.f32 0.0, %v1366
    %1368 = vdwg.mxu0
    %v1369 = vsub.f32 %v38, %v1367
    %v1370 = vmul.f32 %v1369, 0.5
    %v1372 = vsel %vm154, %v1321, 0
    %1374 = vmatpush.msra.mxu0 0.0
    %1375 = vmatpush.msra.mxu0 0.0
    %1376 = vmatpush.msra.mxu0 0.0
    %1377 = vmatpush.msra.mxu0 0.0
    %1378 = vmatpush.msra.mxu0 0.0
    %1379 = vmatpush.msra.mxu0 0.0
    %1380 = vmatpush.msra.mxu0 0.0
    %1381 = vmatpush.msra.mxu0 0.0
    %1382 = vmatpush.msra.mxu0 0.0
    %1383 = vmatpush.msra.mxu0 0.0
    %1384 = vmatpush.msra.mxu0 0.0
    %1385 = vmatpush.msra.mxu0 0.0
    %1386 = vmatpush.msra.mxu0 0.0
    %1387 = vmatpush.msra.mxu0 0.0
    %1388 = vmatpush.msra.mxu0 0.0
    %1389 = vmatpush.msra.mxu0 %v1370
    %1390 = vmatmul.f32.gmra.mxu0 %v1372
    %v1391 = vpop.f32.mrf.mxu0
    %v1392 = vadd.f32 0.0, %v1391
    %1393 = vdwg.mxu0
    %v1395 = vsel %vm154, %v1370, 0
    %1397 = vmatpush.msra.mxu0 0.0
    %1398 = vmatpush.msra.mxu0 0.0
    %1399 = vmatpush.msra.mxu0 0.0
    %1400 = vmatpush.msra.mxu0 0.0
    %1401 = vmatpush.msra.mxu0 0.0
    %1402 = vmatpush.msra.mxu0 0.0
    %1403 = vmatpush.msra.mxu0 0.0
    %1404 = vmatpush.msra.mxu0 0.0
    %1405 = vmatpush.msra.mxu0 0.0
    %1406 = vmatpush.msra.mxu0 0.0
    %1407 = vmatpush.msra.mxu0 0.0
    %1408 = vmatpush.msra.mxu0 0.0
    %1409 = vmatpush.msra.mxu0 0.0
    %1410 = vmatpush.msra.mxu0 0.0
    %1411 = vmatpush.msra.mxu0 0.0
    %1412 = vmatpush.msra.mxu0 %v1344
    %1413 = vmatmul.f32.gmra.mxu0 %v1395
    %v1414 = vpop.f32.mrf.mxu0
    %v1415 = vadd.f32 0.0, %v1414
    %1416 = vdwg.mxu0
    %v1418 = vsel %vm154, %v1415, 0
    %1420 = vmatpush.msra.mxu0 0.0
    %1421 = vmatpush.msra.mxu0 0.0
    %1422 = vmatpush.msra.mxu0 0.0
    %1423 = vmatpush.msra.mxu0 0.0
    %1424 = vmatpush.msra.mxu0 0.0
    %1425 = vmatpush.msra.mxu0 0.0
    %1426 = vmatpush.msra.mxu0 0.0
    %1427 = vmatpush.msra.mxu0 0.0
    %1428 = vmatpush.msra.mxu0 0.0
    %1429 = vmatpush.msra.mxu0 0.0
    %1430 = vmatpush.msra.mxu0 0.0
    %1431 = vmatpush.msra.mxu0 0.0
    %1432 = vmatpush.msra.mxu0 0.0
    %1433 = vmatpush.msra.mxu0 0.0
    %1434 = vmatpush.msra.mxu0 0.0
    %1435 = vmatpush.msra.mxu0 %v1392
    %1436 = vmatmul.f32.gmra.mxu0 %v1418
    %v1437 = vpop.f32.mrf.mxu0
    %v1438 = vadd.f32 0.0, %v1437
    %1439 = vdwg.mxu0
    %v1440 = vsub.f32 %v38, %v1438
    %v1441 = vmul.f32 %v1440, 0.5
    %v1443 = vsel %vm154, %v1392, 0
    %1445 = vmatpush.msra.mxu0 0.0
    %1446 = vmatpush.msra.mxu0 0.0
    %1447 = vmatpush.msra.mxu0 0.0
    %1448 = vmatpush.msra.mxu0 0.0
    %1449 = vmatpush.msra.mxu0 0.0
    %1450 = vmatpush.msra.mxu0 0.0
    %1451 = vmatpush.msra.mxu0 0.0
    %1452 = vmatpush.msra.mxu0 0.0
    %1453 = vmatpush.msra.mxu0 0.0
    %1454 = vmatpush.msra.mxu0 0.0
    %1455 = vmatpush.msra.mxu0 0.0
    %1456 = vmatpush.msra.mxu0 0.0
    %1457 = vmatpush.msra.mxu0 0.0
    %1458 = vmatpush.msra.mxu0 0.0
    %1459 = vmatpush.msra.mxu0 0.0
    %1460 = vmatpush.msra.mxu0 %v1441
    %1461 = vmatmul.f32.gmra.mxu0 %v1443
    %v1462 = vpop.f32.mrf.mxu0
    %v1463 = vadd.f32 0.0, %v1462
    %1464 = vdwg.mxu0
    %v1466 = vsel %vm154, %v1441, 0
    %1468 = vmatpush.msra.mxu0 0.0
    %1469 = vmatpush.msra.mxu0 0.0
    %1470 = vmatpush.msra.mxu0 0.0
    %1471 = vmatpush.msra.mxu0 0.0
    %1472 = vmatpush.msra.mxu0 0.0
    %1473 = vmatpush.msra.mxu0 0.0
    %1474 = vmatpush.msra.mxu0 0.0
    %1475 = vmatpush.msra.mxu0 0.0
    %1476 = vmatpush.msra.mxu0 0.0
    %1477 = vmatpush.msra.mxu0 0.0
    %1478 = vmatpush.msra.mxu0 0.0
    %1479 = vmatpush.msra.mxu0 0.0
    %1480 = vmatpush.msra.mxu0 0.0
    %1481 = vmatpush.msra.mxu0 0.0
    %1482 = vmatpush.msra.mxu0 0.0
    %1483 = vmatpush.msra.mxu0 %v1415
    %1484 = vmatmul.f32.gmra.mxu0 %v1466
    %v1485 = vpop.f32.mrf.mxu0
    %v1486 = vadd.f32 0.0, %v1485
    %1487 = vdwg.mxu0
    %v1489 = vsel %vm154, %v1486, 0
    %1491 = vmatpush.msra.mxu0 0.0
    %1492 = vmatpush.msra.mxu0 0.0
    %1493 = vmatpush.msra.mxu0 0.0
    %1494 = vmatpush.msra.mxu0 0.0
    %1495 = vmatpush.msra.mxu0 0.0
    %1496 = vmatpush.msra.mxu0 0.0
    %1497 = vmatpush.msra.mxu0 0.0
    %1498 = vmatpush.msra.mxu0 0.0
    %1499 = vmatpush.msra.mxu0 0.0
    %1500 = vmatpush.msra.mxu0 0.0
    %1501 = vmatpush.msra.mxu0 0.0
    %1502 = vmatpush.msra.mxu0 0.0
    %1503 = vmatpush.msra.mxu0 0.0
    %1504 = vmatpush.msra.mxu0 0.0
    %1505 = vmatpush.msra.mxu0 0.0
    %1506 = vmatpush.msra.mxu0 %v1463
    %1507 = vmatmul.f32.gmra.mxu0 %v1489
    %v1508 = vpop.f32.mrf.mxu0
    %v1509 = vadd.f32 0.0, %v1508
    %1510 = vdwg.mxu0
    %v1511 = vsub.f32 %v38, %v1509
    %v1512 = vmul.f32 %v1511, 0.5
    %v1514 = vsel %vm154, %v1463, 0
    %1516 = vmatpush.msra.mxu0 0.0
    %1517 = vmatpush.msra.mxu0 0.0
    %1518 = vmatpush.msra.mxu0 0.0
    %1519 = vmatpush.msra.mxu0 0.0
    %1520 = vmatpush.msra.mxu0 0.0
    %1521 = vmatpush.msra.mxu0 0.0
    %1522 = vmatpush.msra.mxu0 0.0
    %1523 = vmatpush.msra.mxu0 0.0
    %1524 = vmatpush.msra.mxu0 0.0
    %1525 = vmatpush.msra.mxu0 0.0
    %1526 = vmatpush.msra.mxu0 0.0
    %1527 = vmatpush.msra.mxu0 0.0
    %1528 = vmatpush.msra.mxu0 0.0
    %1529 = vmatpush.msra.mxu0 0.0
    %1530 = vmatpush.msra.mxu0 0.0
    %1531 = vmatpush.msra.mxu0 %v1512
    %1532 = vmatmul.f32.gmra.mxu0 %v1514
    %v1533 = vpop.f32.mrf.mxu0
    %v1534 = vadd.f32 0.0, %v1533
    %1535 = vdwg.mxu0
    %v1537 = vsel %vm154, %v1512, 0
    %1539 = vmatpush.msra.mxu0 0.0
    %1540 = vmatpush.msra.mxu0 0.0
    %1541 = vmatpush.msra.mxu0 0.0
    %1542 = vmatpush.msra.mxu0 0.0
    %1543 = vmatpush.msra.mxu0 0.0
    %1544 = vmatpush.msra.mxu0 0.0
    %1545 = vmatpush.msra.mxu0 0.0
    %1546 = vmatpush.msra.mxu0 0.0
    %1547 = vmatpush.msra.mxu0 0.0
    %1548 = vmatpush.msra.mxu0 0.0
    %1549 = vmatpush.msra.mxu0 0.0
    %1550 = vmatpush.msra.mxu0 0.0
    %1551 = vmatpush.msra.mxu0 0.0
    %1552 = vmatpush.msra.mxu0 0.0
    %1553 = vmatpush.msra.mxu0 0.0
    %1554 = vmatpush.msra.mxu0 %v1486
    %1555 = vmatmul.f32.gmra.mxu0 %v1537
    %v1556 = vpop.f32.mrf.mxu0
    %v1557 = vadd.f32 0.0, %v1556
    %1558 = vdwg.mxu0
    %v1560 = vsel %vm154, %v1557, 0
    %1562 = vmatpush.msra.mxu0 0.0
    %1563 = vmatpush.msra.mxu0 0.0
    %1564 = vmatpush.msra.mxu0 0.0
    %1565 = vmatpush.msra.mxu0 0.0
    %1566 = vmatpush.msra.mxu0 0.0
    %1567 = vmatpush.msra.mxu0 0.0
    %1568 = vmatpush.msra.mxu0 0.0
    %1569 = vmatpush.msra.mxu0 0.0
    %1570 = vmatpush.msra.mxu0 0.0
    %1571 = vmatpush.msra.mxu0 0.0
    %1572 = vmatpush.msra.mxu0 0.0
    %1573 = vmatpush.msra.mxu0 0.0
    %1574 = vmatpush.msra.mxu0 0.0
    %1575 = vmatpush.msra.mxu0 0.0
    %1576 = vmatpush.msra.mxu0 0.0
    %1577 = vmatpush.msra.mxu0 %v1534
    %1578 = vmatmul.f32.gmra.mxu0 %v1560
    %v1579 = vpop.f32.mrf.mxu0
    %v1580 = vadd.f32 0.0, %v1579
    %1581 = vdwg.mxu0
    %v1582 = vsub.f32 %v38, %v1580
    %v1583 = vmul.f32 %v1582, 0.5
    %v1585 = vsel %vm154, %v1534, 0
    %1587 = vmatpush.msra.mxu0 0.0
    %1588 = vmatpush.msra.mxu0 0.0
    %1589 = vmatpush.msra.mxu0 0.0
    %1590 = vmatpush.msra.mxu0 0.0
    %1591 = vmatpush.msra.mxu0 0.0
    %1592 = vmatpush.msra.mxu0 0.0
    %1593 = vmatpush.msra.mxu0 0.0
    %1594 = vmatpush.msra.mxu0 0.0
    %1595 = vmatpush.msra.mxu0 0.0
    %1596 = vmatpush.msra.mxu0 0.0
    %1597 = vmatpush.msra.mxu0 0.0
    %1598 = vmatpush.msra.mxu0 0.0
    %1599 = vmatpush.msra.mxu0 0.0
    %1600 = vmatpush.msra.mxu0 0.0
    %1601 = vmatpush.msra.mxu0 0.0
    %1602 = vmatpush.msra.mxu0 %v1583
    %1603 = vmatmul.f32.gmra.mxu0 %v1585
    %v1604 = vpop.f32.mrf.mxu0
    %v1605 = vadd.f32 0.0, %v1604
    %1606 = vdwg.mxu0
    %v1608 = vsel %vm154, %v1583, 0
    %1610 = vmatpush.msra.mxu0 0.0
    %1611 = vmatpush.msra.mxu0 0.0
    %1612 = vmatpush.msra.mxu0 0.0
    %1613 = vmatpush.msra.mxu0 0.0
    %1614 = vmatpush.msra.mxu0 0.0
    %1615 = vmatpush.msra.mxu0 0.0
    %1616 = vmatpush.msra.mxu0 0.0
    %1617 = vmatpush.msra.mxu0 0.0
    %1618 = vmatpush.msra.mxu0 0.0
    %1619 = vmatpush.msra.mxu0 0.0
    %1620 = vmatpush.msra.mxu0 0.0
    %1621 = vmatpush.msra.mxu0 0.0
    %1622 = vmatpush.msra.mxu0 0.0
    %1623 = vmatpush.msra.mxu0 0.0
    %1624 = vmatpush.msra.mxu0 0.0
    %1625 = vmatpush.msra.mxu0 %v1557
    %1626 = vmatmul.f32.gmra.mxu0 %v1608
    %v1627 = vpop.f32.mrf.mxu0
    %v1628 = vadd.f32 0.0, %v1627
    %1629 = vdwg.mxu0
    %v1631 = vsel %vm154, %v1628, 0
    %1633 = vmatpush.msra.mxu0 0.0
    %1634 = vmatpush.msra.mxu0 0.0
    %1635 = vmatpush.msra.mxu0 0.0
    %1636 = vmatpush.msra.mxu0 0.0
    %1637 = vmatpush.msra.mxu0 0.0
    %1638 = vmatpush.msra.mxu0 0.0
    %1639 = vmatpush.msra.mxu0 0.0
    %1640 = vmatpush.msra.mxu0 0.0
    %1641 = vmatpush.msra.mxu0 0.0
    %1642 = vmatpush.msra.mxu0 0.0
    %1643 = vmatpush.msra.mxu0 0.0
    %1644 = vmatpush.msra.mxu0 0.0
    %1645 = vmatpush.msra.mxu0 0.0
    %1646 = vmatpush.msra.mxu0 0.0
    %1647 = vmatpush.msra.mxu0 0.0
    %1648 = vmatpush.msra.mxu0 %v1605
    %1649 = vmatmul.f32.gmra.mxu0 %v1631
    %v1650 = vpop.f32.mrf.mxu0
    %v1651 = vadd.f32 0.0, %v1650
    %1652 = vdwg.mxu0
    %v1653 = vsub.f32 %v38, %v1651
    %v1654 = vmul.f32 %v1653, 0.5
    %v1656 = vsel %vm154, %v1605, 0
    %1658 = vmatpush.msra.mxu0 0.0
    %1659 = vmatpush.msra.mxu0 0.0
    %1660 = vmatpush.msra.mxu0 0.0
    %1661 = vmatpush.msra.mxu0 0.0
    %1662 = vmatpush.msra.mxu0 0.0
    %1663 = vmatpush.msra.mxu0 0.0
    %1664 = vmatpush.msra.mxu0 0.0
    %1665 = vmatpush.msra.mxu0 0.0
    %1666 = vmatpush.msra.mxu0 0.0
    %1667 = vmatpush.msra.mxu0 0.0
    %1668 = vmatpush.msra.mxu0 0.0
    %1669 = vmatpush.msra.mxu0 0.0
    %1670 = vmatpush.msra.mxu0 0.0
    %1671 = vmatpush.msra.mxu0 0.0
    %1672 = vmatpush.msra.mxu0 0.0
    %1673 = vmatpush.msra.mxu0 %v1654
    %1674 = vmatmul.f32.gmra.mxu0 %v1656
    %v1675 = vpop.f32.mrf.mxu0
    %v1676 = vadd.f32 0.0, %v1675
    %1677 = vdwg.mxu0
    %v1679 = vsel %vm154, %v1654, 0
    %1681 = vmatpush.msra.mxu0 0.0
    %1682 = vmatpush.msra.mxu0 0.0
    %1683 = vmatpush.msra.mxu0 0.0
    %1684 = vmatpush.msra.mxu0 0.0
    %1685 = vmatpush.msra.mxu0 0.0
    %1686 = vmatpush.msra.mxu0 0.0
    %1687 = vmatpush.msra.mxu0 0.0
    %1688 = vmatpush.msra.mxu0 0.0
    %1689 = vmatpush.msra.mxu0 0.0
    %1690 = vmatpush.msra.mxu0 0.0
    %1691 = vmatpush.msra.mxu0 0.0
    %1692 = vmatpush.msra.mxu0 0.0
    %1693 = vmatpush.msra.mxu0 0.0
    %1694 = vmatpush.msra.mxu0 0.0
    %1695 = vmatpush.msra.mxu0 0.0
    %1696 = vmatpush.msra.mxu0 %v1628
    %1697 = vmatmul.f32.gmra.mxu0 %v1679
    %v1698 = vpop.f32.mrf.mxu0
    %v1699 = vadd.f32 0.0, %v1698
    %1700 = vdwg.mxu0
    %v1702 = vsel %vm154, %v1699, 0
    %1704 = vmatpush.msra.mxu0 0.0
    %1705 = vmatpush.msra.mxu0 0.0
    %1706 = vmatpush.msra.mxu0 0.0
    %1707 = vmatpush.msra.mxu0 0.0
    %1708 = vmatpush.msra.mxu0 0.0
    %1709 = vmatpush.msra.mxu0 0.0
    %1710 = vmatpush.msra.mxu0 0.0
    %1711 = vmatpush.msra.mxu0 0.0
    %1712 = vmatpush.msra.mxu0 0.0
    %1713 = vmatpush.msra.mxu0 0.0
    %1714 = vmatpush.msra.mxu0 0.0
    %1715 = vmatpush.msra.mxu0 0.0
    %1716 = vmatpush.msra.mxu0 0.0
    %1717 = vmatpush.msra.mxu0 0.0
    %1718 = vmatpush.msra.mxu0 0.0
    %1719 = vmatpush.msra.mxu0 %v1676
    %1720 = vmatmul.f32.gmra.mxu0 %v1702
    %v1721 = vpop.f32.mrf.mxu0
    %v1722 = vadd.f32 0.0, %v1721
    %1723 = vdwg.mxu0
    %v1724 = vsub.f32 %v38, %v1722
    %v1725 = vmul.f32 %v1724, 0.5
    %v1727 = vsel %vm154, %v1676, 0
    %1729 = vmatpush.msra.mxu0 0.0
    %1730 = vmatpush.msra.mxu0 0.0
    %1731 = vmatpush.msra.mxu0 0.0
    %1732 = vmatpush.msra.mxu0 0.0
    %1733 = vmatpush.msra.mxu0 0.0
    %1734 = vmatpush.msra.mxu0 0.0
    %1735 = vmatpush.msra.mxu0 0.0
    %1736 = vmatpush.msra.mxu0 0.0
    %1737 = vmatpush.msra.mxu0 0.0
    %1738 = vmatpush.msra.mxu0 0.0
    %1739 = vmatpush.msra.mxu0 0.0
    %1740 = vmatpush.msra.mxu0 0.0
    %1741 = vmatpush.msra.mxu0 0.0
    %1742 = vmatpush.msra.mxu0 0.0
    %1743 = vmatpush.msra.mxu0 0.0
    %1744 = vmatpush.msra.mxu0 %v1725
    %1745 = vmatmul.f32.gmra.mxu0 %v1727
    %v1746 = vpop.f32.mrf.mxu0
    %v1747 = vadd.f32 0.0, %v1746
    %1748 = vdwg.mxu0
    %v1750 = vsel %vm154, %v1725, 0
    %1752 = vmatpush.msra.mxu0 0.0
    %1753 = vmatpush.msra.mxu0 0.0
    %1754 = vmatpush.msra.mxu0 0.0
    %1755 = vmatpush.msra.mxu0 0.0
    %1756 = vmatpush.msra.mxu0 0.0
    %1757 = vmatpush.msra.mxu0 0.0
    %1758 = vmatpush.msra.mxu0 0.0
    %1759 = vmatpush.msra.mxu0 0.0
    %1760 = vmatpush.msra.mxu0 0.0
    %1761 = vmatpush.msra.mxu0 0.0
    %1762 = vmatpush.msra.mxu0 0.0
    %1763 = vmatpush.msra.mxu0 0.0
    %1764 = vmatpush.msra.mxu0 0.0
    %1765 = vmatpush.msra.mxu0 0.0
    %1766 = vmatpush.msra.mxu0 0.0
    %1767 = vmatpush.msra.mxu0 %v1699
    %1768 = vmatmul.f32.gmra.mxu0 %v1750
    %v1769 = vpop.f32.mrf.mxu0
    %v1770 = vadd.f32 0.0, %v1769
    %1771 = vdwg.mxu0
    %v1773 = vsel %vm154, %v1770, 0
    %1775 = vmatpush.msra.mxu0 0.0
    %1776 = vmatpush.msra.mxu0 0.0
    %1777 = vmatpush.msra.mxu0 0.0
    %1778 = vmatpush.msra.mxu0 0.0
    %1779 = vmatpush.msra.mxu0 0.0
    %1780 = vmatpush.msra.mxu0 0.0
    %1781 = vmatpush.msra.mxu0 0.0
    %1782 = vmatpush.msra.mxu0 0.0
    %1783 = vmatpush.msra.mxu0 0.0
    %1784 = vmatpush.msra.mxu0 0.0
    %1785 = vmatpush.msra.mxu0 0.0
    %1786 = vmatpush.msra.mxu0 0.0
    %1787 = vmatpush.msra.mxu0 0.0
    %1788 = vmatpush.msra.mxu0 0.0
    %1789 = vmatpush.msra.mxu0 0.0
    %1790 = vmatpush.msra.mxu0 %v1747
    %1791 = vmatmul.f32.gmra.mxu0 %v1773
    %v1792 = vpop.f32.mrf.mxu0
    %v1793 = vadd.f32 0.0, %v1792
    %1794 = vdwg.mxu0
    %v1795 = vsub.f32 %v38, %v1793
    %v1796 = vmul.f32 %v1795, 0.5
    %v1798 = vsel %vm154, %v1796, 0
    %1800 = vmatpush.msra.mxu0 0.0
    %1801 = vmatpush.msra.mxu0 0.0
    %1802 = vmatpush.msra.mxu0 0.0
    %1803 = vmatpush.msra.mxu0 0.0
    %1804 = vmatpush.msra.mxu0 0.0
    %1805 = vmatpush.msra.mxu0 0.0
    %1806 = vmatpush.msra.mxu0 0.0
    %1807 = vmatpush.msra.mxu0 0.0
    %1808 = vmatpush.msra.mxu0 0.0
    %1809 = vmatpush.msra.mxu0 0.0
    %1810 = vmatpush.msra.mxu0 0.0
    %1811 = vmatpush.msra.mxu0 0.0
    %1812 = vmatpush.msra.mxu0 0.0
    %1813 = vmatpush.msra.mxu0 0.0
    %1814 = vmatpush.msra.mxu0 0.0
    %1815 = vmatpush.msra.mxu0 %v1770
    %1816 = vmatmul.f32.gmra.mxu0 %v1798
    %v1817 = vpop.f32.mrf.mxu0
    %v1818 = vadd.f32 0.0, %v1817
    %1819 = vdwg.mxu0
    %v1820 = vrsqrt.pop %v1120
    %v1821 = vmul.f32 %v1820, %v1120
    %v1822 = vmul.f32 %v1821, %v1820
    %v1823 = vmul.f32 0.5, %v1822
    %v1824 = vsub.f32 1.5, %v1823
    %v1825 = vmul.f32 %v1820, %v1824
    %vm1826 = vweird.f32 %v1120
    %vm1827 = vweird.f32 %v1820
    %vm1828 = vmor %vm1826, %vm1827
    %v1829 = vsel %vm1828, %v1820, %v1825
    %v1830 = vmul.f32 %v1818, %v1829
    %1831 = vmatpush.msra.mxu0 0.0
    %1832 = vmatpush.msra.mxu0 0.0
    %1833 = vmatpush.msra.mxu0 0.0
    %1834 = vmatpush.msra.mxu0 0.0
    %1835 = vmatpush.msra.mxu0 0.0
    %1836 = vmatpush.msra.mxu0 0.0
    %1837 = vmatpush.msra.mxu0 0.0
    %1838 = vmatpush.msra.mxu0 0.0
    %1839 = vmatpush.msra.mxu0 0.0
    %1840 = vmatpush.msra.mxu0 0.0
    %1841 = vmatpush.msra.mxu0 0.0
    %1842 = vmatpush.msra.mxu0 0.0
    %1843 = vmatpush.msra.mxu0 0.0
    %1844 = vmatpush.msra.mxu0 0.0
    %1845 = vmatpush.msra.mxu0 0.0
    %1846 = vmatpush.msra.mxu0 %v1830
    %1847 = vmatmul.f32.gmra.mxu0 %v892
    %v1848 = vpop.f32.mrf.mxu0
    %v1849 = vadd.f32 0.0, %v1848
    %1850 = vdwg.mxu0
    %v1852 = vsel %vm154, %v1849, 0
    %1854 = vmatpush.msra.mxu0 0.0
    %1855 = vmatpush.msra.mxu0 0.0
    %1856 = vmatpush.msra.mxu0 0.0
    %1857 = vmatpush.msra.mxu0 0.0
    %1858 = vmatpush.msra.mxu0 0.0
    %1859 = vmatpush.msra.mxu0 0.0
    %1860 = vmatpush.msra.mxu0 0.0
    %1861 = vmatpush.msra.mxu0 0.0
    %1862 = vmatpush.msra.mxu0 0.0
    %1863 = vmatpush.msra.mxu0 0.0
    %1864 = vmatpush.msra.mxu0 0.0
    %1865 = vmatpush.msra.mxu0 0.0
    %1866 = vmatpush.msra.mxu0 0.0
    %1867 = vmatpush.msra.mxu0 0.0
    %1868 = vmatpush.msra.mxu0 0.0
    %1869 = vmatpush.msra.mxu0 %v1070
    %1870 = vmatmul.f32.gmra.mxu0 %v1852
    %v1871 = vpop.f32.mrf.mxu0
    %v1872 = vadd.f32 0.0, %v1871
    %1873 = vdwg.mxu0
    %v1874 = vsub.f32 %v41, %v1872
    %1876 = vset.pattern.permute.xlu0 0
    %1877 = vperm.xlu0 %1876, %v1874
    %v1878 = vpop.permute.xlu0 %1877
    %1880 = vmatpush.msra.mxu0 0.0
    %1881 = vmatpush.msra.mxu0 0.0
    %1882 = vmatpush.msra.mxu0 0.0
    %1883 = vmatpush.msra.mxu0 0.0
    %1884 = vmatpush.msra.mxu0 0.0
    %1885 = vmatpush.msra.mxu0 0.0
    %1886 = vmatpush.msra.mxu0 0.0
    %1887 = vmatpush.msra.mxu0 0.0
    %1888 = vmatpush.msra.mxu0 0.0
    %1889 = vmatpush.msra.mxu0 0.0
    %1890 = vmatpush.msra.mxu0 0.0
    %1891 = vmatpush.msra.mxu0 0.0
    %1892 = vmatpush.msra.mxu0 0.0
    %1893 = vmatpush.msra.mxu0 0.0
    %1894 = vmatpush.msra.mxu0 0.0
    %1895 = vmatpush.msra.mxu0 %v987
    %1896 = vmatmul.f32.gmra.mxu0 %v1852
    %v1897 = vpop.f32.mrf.mxu0
    %v1898 = vadd.f32 %v1878, %v1897
    %1899 = vdwg.mxu0
    %1900 = vmatpush.msra.mxu0 0.0
    %1901 = vmatpush.msra.mxu0 0.0
    %1902 = vmatpush.msra.mxu0 0.0
    %1903 = vmatpush.msra.mxu0 0.0
    %1904 = vmatpush.msra.mxu0 0.0
    %1905 = vmatpush.msra.mxu0 0.0
    %1906 = vmatpush.msra.mxu0 0.0
    %1907 = vmatpush.msra.mxu0 0.0
    %1908 = vmatpush.msra.mxu0 0.0
    %1909 = vmatpush.msra.mxu0 0.0
    %1910 = vmatpush.msra.mxu0 0.0
    %1911 = vmatpush.msra.mxu0 0.0
    %1912 = vmatpush.msra.mxu0 0.0
    %1913 = vmatpush.msra.mxu0 0.0
    %1914 = vmatpush.msra.mxu0 0.0
    %1915 = vmatpush.msra.mxu0 %v989
    %1916 = vmatmul.f32.gmra.mxu0 %v1852
    %v1917 = vpop.f32.mrf.mxu0
    %v1918 = vadd.f32 %v1878, %v1917
    %1919 = vdwg.mxu0
    %s1920 = scalar_lea.vmem [#allocation5], 16
    %1921 = vst [vmem:[%s1920] sm:$0xff] %v1898
    %s1922 = scalar_lea.vmem [#allocation5], 24
    %1923 = vst [vmem:[%s1922] sm:$0xff] %v1918
    // Predicated region
    $region18: #{tpu_custom_call.1} parent=1 // pred_check
      _
    $region19: #{tpu_custom_call.1} parent=1 // pred_check_branch
      %1925 = sbr.rel (0) target = $region21
    $region20: #{tpu_custom_call.1} parent=1 // pred_region
      %1927 = vsyncadd [#allocation4], 0
      %s1928 = sshll.u32 [#allocation5], 4
      %s1929 = int_to_ptr.vmem [resolvable:$true] %s1928
      %s1930 = sshll.u32 %s3, 4
      %s1931 = int_to_ptr.hbm [resolvable:$true] %s1930
      %1936 = dma.vmem_to_hbm [thread:$0]  %s1929, 512, %s1931, [#allocation4], 128, 128, 8
    $region21: #{tpu_custom_call.1} parent=1 // pred_fallthru
      _
    // Predicated region
    $region22: #{tpu_custom_call.1} parent=1 // pred_check
      _
    $region23: #{tpu_custom_call.1} parent=1 // pred_check_branch
      %1938 = sbr.rel (0) target = $region25
    $region24: #{tpu_custom_call.1} parent=1 // pred_region
      %1940 = dma.done [#allocation4], 512
    $region25: #{tpu_custom_call.1} parent=1 // pred_fallthru
      _
    %1941 = vsyncpa [#allocation3], 1
    %1942 = vsyncpa [#allocation4], 1

</llo_original>
